<compile_context>
chip_gen: v7x
topology: tpu7x:2x2x1
jax: 0.10.0
libtpu: 0.0.40
codegen_flags: <defaults>
</compile_context>

<pallas_src>
import jax
import jax.numpy as jnp
from jax import lax
from jax.experimental import pallas as pl
from jax.experimental.pallas import tpu as pltpu

# ---------------- configuration (small synthetic shapes) ----------------
N_PERSONS   = 4      # number of person instances (eval-mode "batch")
HW          = 16     # flattened spatial size of the backbone feature maps (4x4)
C_BACKBONE  = 256    # stand-in for the 2048-channel ResNet50 output
C_COORD     = 64     # stand-in for the 256-channel CoordinateExtractor output
FEAT_DIM    = 128    # self.feat_dim
EDGE_HID    = 64     # hidden width of the edge-score MLP inside the attention
HIDDEN_DIM  = 128    # self.hidden_dim (classifier hidden width)
IN_DIM      = 4 * FEAT_DIM   # [inter_relats | pers | face | ctx]  (app_type == 'face')
NUM_CLASSES = 2
EDGE_RAW    = 6
COORD_RAW   = 4
COORD_PAD   = 8      # box coords zero-padded 4 -> 8 for the MXU matmul
BN_EPS      = 1e-5

# ---- packed bf16 weight slab: row offsets (all multiples of the bf16 sublane tile 16) ----
ROW_WL = 0                                   # lcl 1x1conv (256,128)
ROW_WC = ROW_WL + C_BACKBONE                 # 256   ctx 1x1conv (256,128)
ROW_WP = ROW_WC + C_BACKBONE                 # 512   person head (320,128)
ROW_WV = ROW_WP + C_BACKBONE + C_COORD       # 832   attention value proj (128,128)
ROW_W1 = ROW_WV + FEAT_DIM                   # 960   classifier layer-1 (512,128)
ROW_W2 = ROW_W1 + IN_DIM                     # 1472  classifier layer-2, lane-padded (128,128)
W_ROWS = ROW_W2 + HIDDEN_DIM                 # 1600

# ---- packed small f32 weight slab (16, 64) ----
SMALL_ROW_CW  = 0      # coordinate-extractor weight, rows 0:8  (coords padded 4 -> 8)
SMALL_ROW_WE1 = 8      # edge-MLP layer-1 weight,     rows 8:14 (6 real edge features)
SMALL_ROWS    = 16

# ---- packed f32 bias row (1, 1024): all lane offsets are multiples of 128 ----
OFF_BL, OFF_BC, OFF_BP, OFF_B1 = 0, 128, 256, 384
OFF_B2, OFF_CB, OFF_BE1, OFF_WE2 = 512, 640, 768, 896
BIAS_W = 1024


# =====================  fused Pallas kernel  =====================

def _prn_fused_kernel(face_ref, ctx_ref, img_ref, coords_ref, edges_ref,
                      w_ref, sw_ref, bias_ref, o_ref):
    n = face_ref.shape[0]
    f32, bf16 = jnp.float32, jnp.bfloat16

    # --- packed biases: static 128-aligned lane slices (free) ---
    bl  = bias_ref[:, OFF_BL:OFF_BL + FEAT_DIM]
    bc  = bias_ref[:, OFF_BC:OFF_BC + FEAT_DIM]
    bp  = bias_ref[:, OFF_BP:OFF_BP + FEAT_DIM]
    b1  = bias_ref[:, OFF_B1:OFF_B1 + HIDDEN_DIM]
    b2w = bias_ref[:, OFF_B2:OFF_B2 + 128]            # logits bias, lane-padded to 128
    cb  = bias_ref[:, OFF_CB:OFF_CB + C_COORD]
    be1 = bias_ref[:, OFF_BE1:OFF_BE1 + EDGE_HID]
    we2 = bias_ref[:, OFF_WE2:OFF_WE2 + EDGE_HID]

    # --- GAP commuted in front of the BN-folded 1x1 convs: mean(xW) == mean(x)W.
    #     Feature maps arrive bf16; the HW mean is accumulated in f32, then rounded
    #     once to bf16 for the MXU. ---
    face_pool = jnp.mean(face_ref[...].astype(f32), axis=1).astype(bf16)    # (N, Cb)
    ctx_pool  = jnp.mean(ctx_ref[...].astype(f32),  axis=1).astype(bf16)
    img_pool  = jnp.mean(img_ref[...].astype(f32),  axis=1).astype(bf16)

    face_feats = jnp.dot(face_pool, w_ref[ROW_WL:ROW_WL + C_BACKBONE, :],
                         preferred_element_type=f32) + bl                    # (N, F)
    face_ctx_feats = jnp.dot(ctx_pool, w_ref[ROW_WC:ROW_WC + C_BACKBONE, :],
                             preferred_element_type=f32) + bc                # (N, F)

    # --- CoordinateExtractor: linear + ReLU (coords zero-padded 4 -> 8) ---
    coord_feats = jnp.maximum(
        jnp.dot(coords_ref[...], sw_ref[SMALL_ROW_CW:SMALL_ROW_CW + COORD_PAD, :],
                preferred_element_type=f32) + cb, 0.0)                       # (N, Cc)

    # --- PersonFeatureExtractor on [img_feats | coord_feats] without materializing the
    #     concat: split matmul over the two channel groups of one (320,128) weight ref. ---
    pers_feats = (jnp.dot(img_pool, w_ref[ROW_WP:ROW_WP + C_BACKBONE, :],
                          preferred_element_type=f32)
                  + jnp.dot(coord_feats.astype(bf16),
                            w_ref[ROW_WP + C_BACKBONE:ROW_WP + C_BACKBONE + C_COORD, :],
                            preferred_element_type=f32)
                  + bp)                                                      # (N, F)

    app_feats = face_feats                                                   # app_type == 'face'

    # --- Inter-person attention.  Edge MLP = 6 VPU outer-product terms (no broadcast_to
    #     of the weight, no batch-4 matmul lowering); value projection computed once. ---
    if n > 1:
        e3 = edges_ref[...]                                                  # (N, N, 6) f32
        we1 = sw_ref[SMALL_ROW_WE1:SMALL_ROW_WE1 + 8, :]                     # (8, Eh); rows 6,7 = 0
        acc = e3[:, :, 0:1] * we1[0:1][None]                                 # (N, N, Eh)
        for e_idx in range(1, EDGE_RAW):
            acc = acc + e3[:, :, e_idx:e_idx + 1] * we1[e_idx:e_idx + 1][None]
        h = jnp.maximum(acc + be1[None], 0.0)                                # (N, N, Eh)
        s = jnp.sum(h * we2[None], axis=-1)                                  # (N, N)  VPU+XLU
        ii = lax.broadcasted_iota(jnp.int32, (n, n), 0)
        jj = lax.broadcasted_iota(jnp.int32, (n, n), 1)
        s = jnp.where(ii == jj, -jnp.inf, s)                                 # mask self-edges
        m = jnp.max(s, axis=1, keepdims=True)
        p = jnp.exp(s - m)
        attn = p * pl.reciprocal(jnp.sum(p, axis=1, keepdims=True), approx=True)  # EUP recip
        v = jnp.dot(app_feats.astype(bf16), w_ref[ROW_WV:ROW_WV + FEAT_DIM, :],
                    preferred_element_type=f32)                              # (N, F), once
        inter = jnp.dot(attn.astype(bf16), v.astype(bf16),
                        preferred_element_type=f32)                          # (N, F)
    else:
        inter = jnp.zeros_like(face_feats)

    # --- FeatureClassifier on [inter | pers | face | ctx]: the (512,128) first-layer
    #     weight stays one ref; static 128-row slices replace an in-kernel concatenate. ---
    hcl = jnp.maximum(
        jnp.dot(inter.astype(bf16),
                w_ref[ROW_W1 + 0 * FEAT_DIM:ROW_W1 + 1 * FEAT_DIM, :], preferred_element_type=f32)
        + jnp.dot(pers_feats.astype(bf16),
                  w_ref[ROW_W1 + 1 * FEAT_DIM:ROW_W1 + 2 * FEAT_DIM, :], preferred_element_type=f32)
        + jnp.dot(face_feats.astype(bf16),
                  w_ref[ROW_W1 + 2 * FEAT_DIM:ROW_W1 + 3 * FEAT_DIM, :], preferred_element_type=f32)
        + jnp.dot(face_ctx_feats.astype(bf16),
                  w_ref[ROW_W1 + 3 * FEAT_DIM:ROW_W1 + 4 * FEAT_DIM, :], preferred_element_type=f32)
        + b1, 0.0)                                                           # (N, H)
    # final layer: weight lane-padded to 128 (lane-dense MXU result); store first 2 lanes.
    logits_w = jnp.dot(hcl.astype(bf16), w_ref[ROW_W2:ROW_W2 + HIDDEN_DIM, :],
                       preferred_element_type=f32) + b2w                     # (N, 128)
    o_ref[...] = logits_w[:, :NUM_CLASSES]                                   # (N, 2)


# =====================  glue (plain JAX)  =====================

def get_edges_eval(bboxes):
    """Vectorized port of PRN.get_edges (eval branch).  bboxes: (N, 4) [x, y, w, h].

    NOTE: floor_divide on floats for the centers and arctan(dy/(dx+1e-6)) faithfully
    reproduce the PyTorch quirks; fragile near dx ~= -1e-6 (kept on purpose).
    """
    x, y, w, h = bboxes[:, 0], bboxes[:, 1], bboxes[:, 2], bboxes[:, 3]
    cx = jnp.floor_divide(x + w, 2.0)
    cy = jnp.floor_divide(y + h, 2.0)
    dx = cx[None, :] - cx[:, None]          # ctr_x2 - ctr_x1
    dy = cy[None, :] - cy[:, None]
    feats = jnp.stack(
        [
            jnp.abs(dx),
            jnp.abs(dy),
            jnp.abs(dx + dy),
            jnp.sqrt(dx ** 2 + dy ** 2),
            jnp.arctan(dy / (dx + 1e-6)),
            jnp.arctan2(dy, dx + 1e-6),
        ],
        axis=-1,
    ).astype(jnp.float32)                   # (N, N, 6)
    n = bboxes.shape[0]
    return feats * (1.0 - jnp.eye(n, dtype=jnp.float32))[:, :, None]   # diag left at 0


def _fold_bn(w, gamma, beta, mean, var, eps=BN_EPS):
    """Fold eval-mode BatchNorm into the preceding (bias-free) 1x1 conv weights."""
    scale = gamma * lax.rsqrt(var + eps)         # (1, F)
    return w * scale, beta - mean * scale


def prepare_params(params):
    """One-time weight preparation (run ONCE, outside the per-call jit).

    Folds the eval-mode BN into the 1x1 conv weights and packs everything into
    three kernel operands:
      * w     : (1600, 128) bf16 slab  [wl | wc | wp | wv | w1 | w2(lane-padded)]
      * small : (16, 64)    f32 slab   [coord weight (padded 4->8) | edge-MLP weight]
      * bias  : (1, 1024)   f32 row    [bl | bc | bp | b1 | b2 | cb | be1 | we2]
    """
    lcl, ctxp, pp = params["lcl"], params["ctx"], params["pers"]
    a, c = params["attn"], params["clf"]

    wl, bl = _fold_bn(lcl["w"], lcl["gamma"], lcl["beta"], lcl["mean"], lcl["var"])
    wc, bc = _fold_bn(ctxp["w"], ctxp["gamma"], ctxp["beta"], ctxp["mean"], ctxp["var"])
    wp, bp = _fold_bn(pp["w"], pp["gamma"], pp["beta"], pp["mean"], pp["var"])

    w2_pad = jnp.zeros((HIDDEN_DIM, 128), jnp.float32).at[:, :NUM_CLASSES].set(c["w2"])
    w_slab = jnp.concatenate([wl, wc, wp, a["wv"], c["w1"], w2_pad], axis=0)
    assert w_slab.shape == (W_ROWS, FEAT_DIM), w_slab.shape
    w_slab = w_slab.astype(jnp.bfloat16)

    cw_pad = jnp.zeros((COORD_PAD, C_COORD), jnp.float32).at[:COORD_RAW].set(params["coord_w"])
    small = jnp.zeros((SMALL_ROWS, EDGE_HID), jnp.float32)
    small = small.at[SMALL_ROW_CW:SMALL_ROW_CW + COORD_PAD].set(cw_pad)
    small = small.at[SMALL_ROW_WE1:SMALL_ROW_WE1 + EDGE_RAW].set(a["we1"])

    bias = jnp.zeros((1, BIAS_W), jnp.float32)
    bias = bias.at[:, OFF_BL:OFF_BL + FEAT_DIM].set(bl)
    bias = bias.at[:, OFF_BC:OFF_BC + FEAT_DIM].set(bc)
    bias = bias.at[:, OFF_BP:OFF_BP + FEAT_DIM].set(bp)
    bias = bias.at[:, OFF_B1:OFF_B1 + HIDDEN_DIM].set(c["b1"])
    bias = bias.at[:, OFF_B2:OFF_B2 + NUM_CLASSES].set(c["b2"])
    bias = bias.at[:, OFF_CB:OFF_CB + C_COORD].set(params["coord_b"])
    bias = bias.at[:, OFF_BE1:OFF_BE1 + EDGE_HID].set(a["be1"])
    bias = bias.at[:, OFF_WE2:OFF_WE2 + EDGE_HID].set(a["we2"])

    return dict(w=w_slab, small=small, bias=bias)


def init_params(key):
    ks = jax.random.split(key, 10)
    s = 0.05

    def head(k, c_in, f):
        kw, kg, kb, km = jax.random.split(k, 4)
        return dict(
            w=s * jax.random.normal(kw, (c_in, f), jnp.float32),
            gamma=1.0 + 0.1 * jax.random.normal(kg, (1, f), jnp.float32),
            beta=0.1 * jax.random.normal(kb, (1, f), jnp.float32),
            mean=0.1 * jax.random.normal(km, (1, f), jnp.float32),
            var=jnp.ones((1, f), jnp.float32),
        )

    def clf(k, d_in, hid, d_out):
        k1, k2, k3, k4 = jax.random.split(k, 4)
        return dict(
            w1=s * jax.random.normal(k1, (d_in, hid), jnp.float32),
            b1=s * jax.random.normal(k2, (1, hid), jnp.float32),
            w2=s * jax.random.normal(k3, (hid, d_out), jnp.float32),
            b2=s * jax.random.normal(k4, (1, d_out), jnp.float32),
        )

    return dict(
        lcl=head(ks[0], C_BACKBONE, FEAT_DIM),                  # lcl_extr 1x1conv+bn+gap
        ctx=head(ks[1], C_BACKBONE, FEAT_DIM),                  # ctx_extr 1x1conv+bn+gap
        pers=head(ks[2], C_BACKBONE + C_COORD, FEAT_DIM),       # PersonFeatureExtractor
        attn=dict(
            we1=s * jax.random.normal(ks[3], (EDGE_RAW, EDGE_HID), jnp.float32),
            be1=s * jax.random.normal(ks[4], (1, EDGE_HID), jnp.float32),
            we2=s * jax.random.normal(ks[5], (1, EDGE_HID), jnp.float32),
            wv=s * jax.random.normal(ks[6], (FEAT_DIM, FEAT_DIM), jnp.float32),
        ),
        coord_w=s * jax.random.normal(ks[7], (COORD_RAW, C_COORD), jnp.float32),
        coord_b=s * jax.random.normal(ks[8], (1, C_COORD), jnp.float32),
        clf=clf(ks[9], IN_DIM, HIDDEN_DIM, NUM_CLASSES),
    )


@jax.jit
def prn_forward_eval(prep, face_bb, ctx_bb, img_bb, coords, bboxes):
    """Eval-mode forward of PRN (app_type == 'face') — single fused pallas_call."""
    n = face_bb.shape[0]
    bf16 = jnp.bfloat16
    edges = get_edges_eval(bboxes)                                            # (N, N, 6)
    coords_p = jnp.pad(coords, ((0, 0), (0, COORD_PAD - coords.shape[1])))    # (N, 8)

    # Advisory cost so XLA schedules neighbors around the call sensibly.
    flops = int(2 * n * (3 * C_BACKBONE * FEAT_DIM + C_COORD * FEAT_DIM
                         + COORD_PAD * C_COORD + FEAT_DIM * FEAT_DIM
                         + n * FEAT_DIM + IN_DIM * HIDDEN_DIM + HIDDEN_DIM * 128)
                + 2 * n * n * EDGE_RAW * EDGE_HID)
    bytes_accessed = int(3 * n * HW * C_BACKBONE * 2           # bf16 feature maps
                         + W_ROWS * FEAT_DIM * 2               # bf16 weight slab
                         + (SMALL_ROWS * EDGE_HID + BIAS_W) * 4
                         + (n * n * EDGE_RAW + n * COORD_PAD + n * NUM_CLASSES) * 4)
    cost = pl.CostEstimate(flops=flops, transcendentals=int(n * n + n),
                           bytes_accessed=bytes_accessed)

    vmem_spec = pl.BlockSpec(memory_space=pltpu.MemorySpace.VMEM)
    return pl.pallas_call(
        _prn_fused_kernel,
        out_shape=jax.ShapeDtypeStruct((n, NUM_CLASSES), jnp.float32),
        in_specs=[vmem_spec] * 8,
        out_specs=vmem_spec,
        cost_estimate=cost,
    )(face_bb.astype(bf16), ctx_bb.astype(bf16), img_bb.astype(bf16),
      coords_p, edges, prep["w"], prep["small"], prep["bias"])


# =====================  main  =====================

if __name__ == "__main__":
    key = jax.random.PRNGKey(0)
    k_par, k_face, k_ctx, k_img, k_coord, k_box = jax.random.split(key, 6)

    params = init_params(k_par)
    prep = prepare_params(params)     # one-time: fold BN, pack & bf16-cast weights

    face_bb = jax.random.normal(k_face, (N_PERSONS, HW, C_BACKBONE), jnp.float32)
    ctx_bb = jax.random.normal(k_ctx, (N_PERSONS, HW, C_BACKBONE), jnp.float32)
    img_bb = jax.random.normal(k_img, (N_PERSONS, HW, C_BACKBONE), jnp.float32)
    coords = jax.random.uniform(k_coord, (N_PERSONS, COORD_RAW), jnp.float32)
    bboxes = 200.0 * jax.random.uniform(k_box, (N_PERSONS, 4), jnp.float32)

    logits = prn_forward_eval(prep, face_bb, ctx_bb, img_bb, coords, bboxes)
    logits = jax.block_until_ready(logits)

    assert logits.shape == (N_PERSONS, NUM_CLASSES), logits.shape
    assert bool(jnp.all(jnp.isfinite(logits)))
    print("KERNEL_OK")
</pallas_src>

<mosaic_0001>
module attributes {stable_mosaic.version = 11 : i64} {
  func.func @_prn_fused_kernel(%arg0: memref<4x16x256xbf16, #tpu.memory_space<vmem>>, %arg1: memref<4x16x256xbf16, #tpu.memory_space<vmem>>, %arg2: memref<4x16x256xbf16, #tpu.memory_space<vmem>>, %arg3: memref<4x8xf32, #tpu.memory_space<vmem>>, %arg4: memref<4x4x6xf32, #tpu.memory_space<vmem>>, %arg5: memref<1600x128xbf16, #tpu.memory_space<vmem>>, %arg6: memref<16x64xf32, #tpu.memory_space<vmem>>, %arg7: memref<1x1024xf32, #tpu.memory_space<vmem>>, %arg8: memref<4x2xf32, #tpu.memory_space<vmem>>) attributes {dimension_semantics = [], scalar_prefetch = 0 : i64, scratch_operands = 0 : i64, tpu.core_type = #tpu.core_type<tc>} {
    %c0 = arith.constant 0 : index
    %c0_0 = arith.constant 0 : index
    %0 = vector.load %arg7[%c0, %c0_0] : memref<1x1024xf32, #tpu.memory_space<vmem>>, vector<1x128xf32>
    %c0_1 = arith.constant 0 : index
    %c128 = arith.constant 128 : index
    %1 = vector.load %arg7[%c0_1, %c128] : memref<1x1024xf32, #tpu.memory_space<vmem>>, vector<1x128xf32>
    %c0_2 = arith.constant 0 : index
    %c256 = arith.constant 256 : index
    %2 = vector.load %arg7[%c0_2, %c256] : memref<1x1024xf32, #tpu.memory_space<vmem>>, vector<1x128xf32>
    %c0_3 = arith.constant 0 : index
    %c384 = arith.constant 384 : index
    %3 = vector.load %arg7[%c0_3, %c384] : memref<1x1024xf32, #tpu.memory_space<vmem>>, vector<1x128xf32>
    %c0_4 = arith.constant 0 : index
    %c512 = arith.constant 512 : index
    %4 = vector.load %arg7[%c0_4, %c512] : memref<1x1024xf32, #tpu.memory_space<vmem>>, vector<1x128xf32>
    %c0_5 = arith.constant 0 : index
    %c640 = arith.constant 640 : index
    %5 = vector.load %arg7[%c0_5, %c640] : memref<1x1024xf32, #tpu.memory_space<vmem>>, vector<1x64xf32>
    %c0_6 = arith.constant 0 : index
    %c768 = arith.constant 768 : index
    %6 = vector.load %arg7[%c0_6, %c768] : memref<1x1024xf32, #tpu.memory_space<vmem>>, vector<1x64xf32>
    %c0_7 = arith.constant 0 : index
    %c896 = arith.constant 896 : index
    %7 = vector.load %arg7[%c0_7, %c896] : memref<1x1024xf32, #tpu.memory_space<vmem>>, vector<1x64xf32>
    %c0_8 = arith.constant 0 : index
    %c0_9 = arith.constant 0 : index
    %c0_10 = arith.constant 0 : index
    %8 = vector.load %arg0[%c0_8, %c0_9, %c0_10] : memref<4x16x256xbf16, #tpu.memory_space<vmem>>, vector<4x16x256xbf16>
    %9 = arith.extf %8 : vector<4x16x256xbf16> to vector<4x16x256xf32>
    %cst = arith.constant dense<0.000000e+00> : vector<4x256xf32>
    %10 = vector.multi_reduction <add>, %9, %cst [1] : vector<4x16x256xf32> to vector<4x256xf32>
    %cst_11 = arith.constant 1.600000e+01 : f32
    %11 = vector.broadcast %cst_11 : f32 to vector<4x256xf32>
    %12 = arith.divf %10, %11 : vector<4x256xf32>
    %13 = arith.truncf %12 : vector<4x256xf32> to vector<4x256xbf16>
    %c0_12 = arith.constant 0 : index
    %c0_13 = arith.constant 0 : index
    %c0_14 = arith.constant 0 : index
    %14 = vector.load %arg1[%c0_12, %c0_13, %c0_14] : memref<4x16x256xbf16, #tpu.memory_space<vmem>>, vector<4x16x256xbf16>
    %15 = arith.extf %14 : vector<4x16x256xbf16> to vector<4x16x256xf32>
    %cst_15 = arith.constant dense<0.000000e+00> : vector<4x256xf32>
    %16 = vector.multi_reduction <add>, %15, %cst_15 [1] : vector<4x16x256xf32> to vector<4x256xf32>
    %cst_16 = arith.constant 1.600000e+01 : f32
    %17 = vector.broadcast %cst_16 : f32 to vector<4x256xf32>
    %18 = arith.divf %16, %17 : vector<4x256xf32>
    %19 = arith.truncf %18 : vector<4x256xf32> to vector<4x256xbf16>
    %c0_17 = arith.constant 0 : index
    %c0_18 = arith.constant 0 : index
    %c0_19 = arith.constant 0 : index
    %20 = vector.load %arg2[%c0_17, %c0_18, %c0_19] : memref<4x16x256xbf16, #tpu.memory_space<vmem>>, vector<4x16x256xbf16>
    %21 = arith.extf %20 : vector<4x16x256xbf16> to vector<4x16x256xf32>
    %cst_20 = arith.constant dense<0.000000e+00> : vector<4x256xf32>
    %22 = vector.multi_reduction <add>, %21, %cst_20 [1] : vector<4x16x256xf32> to vector<4x256xf32>
    %cst_21 = arith.constant 1.600000e+01 : f32
    %23 = vector.broadcast %cst_21 : f32 to vector<4x256xf32>
    %24 = arith.divf %22, %23 : vector<4x256xf32>
    %25 = arith.truncf %24 : vector<4x256xf32> to vector<4x256xbf16>
    %c0_22 = arith.constant 0 : index
    %c0_23 = arith.constant 0 : index
    %26 = vector.load %arg5[%c0_22, %c0_23] : memref<1600x128xbf16, #tpu.memory_space<vmem>>, vector<256x128xbf16>
    %cst_24 = arith.constant dense<0.000000e+00> : vector<4x128xf32>
    %27 = tpu.matmul %13, %26, %cst_24 {dimension_numbers = #tpu.dot_dimension_numbers<[1], [0], [0], [1], [0, 0, 1, 1], [], []>} : vector<4x256xbf16>, vector<256x128xbf16>, vector<4x128xf32> -> vector<4x128xf32>
    %28 = vector.broadcast %0 : vector<1x128xf32> to vector<4x128xf32>
    %29 = arith.addf %27, %28 : vector<4x128xf32>
    %c256_25 = arith.constant 256 : index
    %c0_26 = arith.constant 0 : index
    %30 = vector.load %arg5[%c256_25, %c0_26] : memref<1600x128xbf16, #tpu.memory_space<vmem>>, vector<256x128xbf16>
    %cst_27 = arith.constant dense<0.000000e+00> : vector<4x128xf32>
    %31 = tpu.matmul %19, %30, %cst_27 {dimension_numbers = #tpu.dot_dimension_numbers<[1], [0], [0], [1], [0, 0, 1, 1], [], []>} : vector<4x256xbf16>, vector<256x128xbf16>, vector<4x128xf32> -> vector<4x128xf32>
    %32 = vector.broadcast %1 : vector<1x128xf32> to vector<4x128xf32>
    %33 = arith.addf %31, %32 : vector<4x128xf32>
    %c0_28 = arith.constant 0 : index
    %c0_29 = arith.constant 0 : index
    %34 = vector.load %arg3[%c0_28, %c0_29] : memref<4x8xf32, #tpu.memory_space<vmem>>, vector<4x8xf32>
    %c0_30 = arith.constant 0 : index
    %c0_31 = arith.constant 0 : index
    %35 = vector.load %arg6[%c0_30, %c0_31] : memref<16x64xf32, #tpu.memory_space<vmem>>, vector<8x64xf32>
    %cst_32 = arith.constant dense<0.000000e+00> : vector<4x64xf32>
    %36 = tpu.matmul %34, %35, %cst_32 {dimension_numbers = #tpu.dot_dimension_numbers<[1], [0], [0], [1], [0, 0, 1, 1], [], []>} : vector<4x8xf32>, vector<8x64xf32>, vector<4x64xf32> -> vector<4x64xf32>
    %37 = vector.broadcast %5 : vector<1x64xf32> to vector<4x64xf32>
    %38 = arith.addf %36, %37 : vector<4x64xf32>
    %cst_33 = arith.constant 0.000000e+00 : f32
    %39 = vector.broadcast %cst_33 : f32 to vector<4x64xf32>
    %40 = arith.maximumf %38, %39 : vector<4x64xf32>
    %c512_34 = arith.constant 512 : index
    %c0_35 = arith.constant 0 : index
    %41 = vector.load %arg5[%c512_34, %c0_35] : memref<1600x128xbf16, #tpu.memory_space<vmem>>, vector<256x128xbf16>
    %cst_36 = arith.constant dense<0.000000e+00> : vector<4x128xf32>
    %42 = tpu.matmul %25, %41, %cst_36 {dimension_numbers = #tpu.dot_dimension_numbers<[1], [0], [0], [1], [0, 0, 1, 1], [], []>} : vector<4x256xbf16>, vector<256x128xbf16>, vector<4x128xf32> -> vector<4x128xf32>
    %43 = arith.truncf %40 : vector<4x64xf32> to vector<4x64xbf16>
    %c768_37 = arith.constant 768 : index
    %c0_38 = arith.constant 0 : index
    %44 = vector.load %arg5[%c768_37, %c0_38] : memref<1600x128xbf16, #tpu.memory_space<vmem>>, vector<64x128xbf16>
    %cst_39 = arith.constant dense<0.000000e+00> : vector<4x128xf32>
    %45 = tpu.matmul %43, %44, %cst_39 {dimension_numbers = #tpu.dot_dimension_numbers<[1], [0], [0], [1], [0, 0, 1, 1], [], []>} : vector<4x64xbf16>, vector<64x128xbf16>, vector<4x128xf32> -> vector<4x128xf32>
    %46 = arith.addf %42, %45 : vector<4x128xf32>
    %47 = vector.broadcast %2 : vector<1x128xf32> to vector<4x128xf32>
    %48 = arith.addf %46, %47 : vector<4x128xf32>
    %c0_40 = arith.constant 0 : index
    %c0_41 = arith.constant 0 : index
    %c0_42 = arith.constant 0 : index
    %49 = vector.load %arg4[%c0_40, %c0_41, %c0_42] : memref<4x4x6xf32, #tpu.memory_space<vmem>>, vector<4x4x6xf32>
    %c8 = arith.constant 8 : index
    %c0_43 = arith.constant 0 : index
    %50 = vector.load %arg6[%c8, %c0_43] : memref<16x64xf32, #tpu.memory_space<vmem>>, vector<8x64xf32>
    %51 = vector.extract_strided_slice %49 {offsets = [0, 0, 0], sizes = [4, 4, 1], strides = [1, 1, 1]} : vector<4x4x6xf32> to vector<4x4x1xf32>
    %52 = vector.extract_strided_slice %50 {offsets = [0, 0], sizes = [1, 64], strides = [1, 1]} : vector<8x64xf32> to vector<1x64xf32>
    %53 = vector.shape_cast %52 : vector<1x64xf32> to vector<1x1x64xf32>
    %54 = vector.broadcast %51 : vector<4x4x1xf32> to vector<4x4x64xf32>
    %55 = vector.broadcast %53 : vector<1x1x64xf32> to vector<4x4x64xf32>
    %56 = arith.mulf %54, %55 : vector<4x4x64xf32>
    %57 = vector.extract_strided_slice %49 {offsets = [0, 0, 1], sizes = [4, 4, 1], strides = [1, 1, 1]} : vector<4x4x6xf32> to vector<4x4x1xf32>
    %58 = vector.extract_strided_slice %50 {offsets = [1, 0], sizes = [1, 64], strides = [1, 1]} : vector<8x64xf32> to vector<1x64xf32>
    %59 = vector.shape_cast %58 : vector<1x64xf32> to vector<1x1x64xf32>
    %60 = vector.broadcast %57 : vector<4x4x1xf32> to vector<4x4x64xf32>
    %61 = vector.broadcast %59 : vector<1x1x64xf32> to vector<4x4x64xf32>
    %62 = arith.mulf %60, %61 : vector<4x4x64xf32>
    %63 = arith.addf %56, %62 : vector<4x4x64xf32>
    %64 = vector.extract_strided_slice %49 {offsets = [0, 0, 2], sizes = [4, 4, 1], strides = [1, 1, 1]} : vector<4x4x6xf32> to vector<4x4x1xf32>
    %65 = vector.extract_strided_slice %50 {offsets = [2, 0], sizes = [1, 64], strides = [1, 1]} : vector<8x64xf32> to vector<1x64xf32>
    %66 = vector.shape_cast %65 : vector<1x64xf32> to vector<1x1x64xf32>
    %67 = vector.broadcast %64 : vector<4x4x1xf32> to vector<4x4x64xf32>
    %68 = vector.broadcast %66 : vector<1x1x64xf32> to vector<4x4x64xf32>
    %69 = arith.mulf %67, %68 : vector<4x4x64xf32>
    %70 = arith.addf %63, %69 : vector<4x4x64xf32>
    %71 = vector.extract_strided_slice %49 {offsets = [0, 0, 3], sizes = [4, 4, 1], strides = [1, 1, 1]} : vector<4x4x6xf32> to vector<4x4x1xf32>
    %72 = vector.extract_strided_slice %50 {offsets = [3, 0], sizes = [1, 64], strides = [1, 1]} : vector<8x64xf32> to vector<1x64xf32>
    %73 = vector.shape_cast %72 : vector<1x64xf32> to vector<1x1x64xf32>
    %74 = vector.broadcast %71 : vector<4x4x1xf32> to vector<4x4x64xf32>
    %75 = vector.broadcast %73 : vector<1x1x64xf32> to vector<4x4x64xf32>
    %76 = arith.mulf %74, %75 : vector<4x4x64xf32>
    %77 = arith.addf %70, %76 : vector<4x4x64xf32>
    %78 = vector.extract_strided_slice %49 {offsets = [0, 0, 4], sizes = [4, 4, 1], strides = [1, 1, 1]} : vector<4x4x6xf32> to vector<4x4x1xf32>
    %79 = vector.extract_strided_slice %50 {offsets = [4, 0], sizes = [1, 64], strides = [1, 1]} : vector<8x64xf32> to vector<1x64xf32>
    %80 = vector.shape_cast %79 : vector<1x64xf32> to vector<1x1x64xf32>
    %81 = vector.broadcast %78 : vector<4x4x1xf32> to vector<4x4x64xf32>
    %82 = vector.broadcast %80 : vector<1x1x64xf32> to vector<4x4x64xf32>
    %83 = arith.mulf %81, %82 : vector<4x4x64xf32>
    %84 = arith.addf %77, %83 : vector<4x4x64xf32>
    %85 = vector.extract_strided_slice %49 {offsets = [0, 0, 5], sizes = [4, 4, 1], strides = [1, 1, 1]} : vector<4x4x6xf32> to vector<4x4x1xf32>
    %86 = vector.extract_strided_slice %50 {offsets = [5, 0], sizes = [1, 64], strides = [1, 1]} : vector<8x64xf32> to vector<1x64xf32>
    %87 = vector.shape_cast %86 : vector<1x64xf32> to vector<1x1x64xf32>
    %88 = vector.broadcast %85 : vector<4x4x1xf32> to vector<4x4x64xf32>
    %89 = vector.broadcast %87 : vector<1x1x64xf32> to vector<4x4x64xf32>
    %90 = arith.mulf %88, %89 : vector<4x4x64xf32>
    %91 = arith.addf %84, %90 : vector<4x4x64xf32>
    %92 = vector.shape_cast %6 : vector<1x64xf32> to vector<1x1x64xf32>
    %93 = vector.broadcast %92 : vector<1x1x64xf32> to vector<4x4x64xf32>
    %94 = arith.addf %91, %93 : vector<4x4x64xf32>
    %cst_44 = arith.constant 0.000000e+00 : f32
    %95 = vector.broadcast %cst_44 : f32 to vector<4x4x64xf32>
    %96 = arith.maximumf %94, %95 : vector<4x4x64xf32>
    %97 = vector.shape_cast %7 : vector<1x64xf32> to vector<1x1x64xf32>
    %98 = vector.broadcast %97 : vector<1x1x64xf32> to vector<4x4x64xf32>
    %99 = arith.mulf %96, %98 : vector<4x4x64xf32>
    %cst_45 = arith.constant dense<0.000000e+00> : vector<4x4xf32>
    %100 = vector.multi_reduction <add>, %99, %cst_45 [2] : vector<4x4x64xf32> to vector<4x4xf32>
    %101 = tpu.iota {dimensions = array<i32: 0>} : vector<4x4xi32>
    %102 = tpu.iota {dimensions = array<i32: 1>} : vector<4x4xi32>
    %103 = arith.cmpi eq, %101, %102 : vector<4x4xi32>
    %cst_46 = arith.constant 0xFF800000 : f32
    %104 = vector.broadcast %cst_46 : f32 to vector<4x4xf32>
    %105 = arith.select %103, %104, %100 : vector<4x4xi1>, vector<4x4xf32>
    %cst_47 = arith.constant dense<0xFF800000> : vector<4xf32>
    %106 = vector.multi_reduction <maximumf>, %105, %cst_47 [1] : vector<4x4xf32> to vector<4xf32>
    %107 = vector.shape_cast %106 : vector<4xf32> to vector<4x1xf32>
    %108 = vector.broadcast %107 : vector<4x1xf32> to vector<4x4xf32>
    %109 = arith.subf %105, %108 : vector<4x4xf32>
    %110 = math.exp %109 : vector<4x4xf32>
    %cst_48 = arith.constant dense<0.000000e+00> : vector<4xf32>
    %111 = vector.multi_reduction <add>, %110, %cst_48 [1] : vector<4x4xf32> to vector<4xf32>
    %112 = vector.shape_cast %111 : vector<4xf32> to vector<4x1xf32>
    %113 = tpu.reciprocal %112 {approx = true} : vector<4x1xf32> -> vector<4x1xf32>
    %114 = vector.broadcast %113 : vector<4x1xf32> to vector<4x4xf32>
    %115 = arith.mulf %110, %114 : vector<4x4xf32>
    %116 = arith.truncf %29 : vector<4x128xf32> to vector<4x128xbf16>
    %c832 = arith.constant 832 : index
    %c0_49 = arith.constant 0 : index
    %117 = vector.load %arg5[%c832, %c0_49] : memref<1600x128xbf16, #tpu.memory_space<vmem>>, vector<128x128xbf16>
    %cst_50 = arith.constant dense<0.000000e+00> : vector<4x128xf32>
    %118 = tpu.matmul %116, %117, %cst_50 {dimension_numbers = #tpu.dot_dimension_numbers<[1], [0], [0], [1], [0, 0, 1, 1], [], []>} : vector<4x128xbf16>, vector<128x128xbf16>, vector<4x128xf32> -> vector<4x128xf32>
    %119 = arith.truncf %115 : vector<4x4xf32> to vector<4x4xbf16>
    %120 = arith.truncf %118 : vector<4x128xf32> to vector<4x128xbf16>
    %cst_51 = arith.constant dense<0.000000e+00> : vector<4x128xf32>
    %121 = tpu.matmul %119, %120, %cst_51 {dimension_numbers = #tpu.dot_dimension_numbers<[1], [0], [0], [1], [0, 0, 1, 1], [], []>} : vector<4x4xbf16>, vector<4x128xbf16>, vector<4x128xf32> -> vector<4x128xf32>
    %122 = arith.truncf %121 : vector<4x128xf32> to vector<4x128xbf16>
    %c960 = arith.constant 960 : index
    %c0_52 = arith.constant 0 : index
    %123 = vector.load %arg5[%c960, %c0_52] : memref<1600x128xbf16, #tpu.memory_space<vmem>>, vector<128x128xbf16>
    %cst_53 = arith.constant dense<0.000000e+00> : vector<4x128xf32>
    %124 = tpu.matmul %122, %123, %cst_53 {dimension_numbers = #tpu.dot_dimension_numbers<[1], [0], [0], [1], [0, 0, 1, 1], [], []>} : vector<4x128xbf16>, vector<128x128xbf16>, vector<4x128xf32> -> vector<4x128xf32>
    %125 = arith.truncf %48 : vector<4x128xf32> to vector<4x128xbf16>
    %c1088 = arith.constant 1088 : index
    %c0_54 = arith.constant 0 : index
    %126 = vector.load %arg5[%c1088, %c0_54] : memref<1600x128xbf16, #tpu.memory_space<vmem>>, vector<128x128xbf16>
    %cst_55 = arith.constant dense<0.000000e+00> : vector<4x128xf32>
    %127 = tpu.matmul %125, %126, %cst_55 {dimension_numbers = #tpu.dot_dimension_numbers<[1], [0], [0], [1], [0, 0, 1, 1], [], []>} : vector<4x128xbf16>, vector<128x128xbf16>, vector<4x128xf32> -> vector<4x128xf32>
    %128 = arith.addf %124, %127 : vector<4x128xf32>
    %129 = arith.truncf %29 : vector<4x128xf32> to vector<4x128xbf16>
    %c1216 = arith.constant 1216 : index
    %c0_56 = arith.constant 0 : index
    %130 = vector.load %arg5[%c1216, %c0_56] : memref<1600x128xbf16, #tpu.memory_space<vmem>>, vector<128x128xbf16>
    %cst_57 = arith.constant dense<0.000000e+00> : vector<4x128xf32>
    %131 = tpu.matmul %129, %130, %cst_57 {dimension_numbers = #tpu.dot_dimension_numbers<[1], [0], [0], [1], [0, 0, 1, 1], [], []>} : vector<4x128xbf16>, vector<128x128xbf16>, vector<4x128xf32> -> vector<4x128xf32>
    %132 = arith.addf %128, %131 : vector<4x128xf32>
    %133 = arith.truncf %33 : vector<4x128xf32> to vector<4x128xbf16>
    %c1344 = arith.constant 1344 : index
    %c0_58 = arith.constant 0 : index
    %134 = vector.load %arg5[%c1344, %c0_58] : memref<1600x128xbf16, #tpu.memory_space<vmem>>, vector<128x128xbf16>
    %cst_59 = arith.constant dense<0.000000e+00> : vector<4x128xf32>
    %135 = tpu.matmul %133, %134, %cst_59 {dimension_numbers = #tpu.dot_dimension_numbers<[1], [0], [0], [1], [0, 0, 1, 1], [], []>} : vector<4x128xbf16>, vector<128x128xbf16>, vector<4x128xf32> -> vector<4x128xf32>
    %136 = arith.addf %132, %135 : vector<4x128xf32>
    %137 = vector.broadcast %3 : vector<1x128xf32> to vector<4x128xf32>
    %138 = arith.addf %136, %137 : vector<4x128xf32>
    %cst_60 = arith.constant 0.000000e+00 : f32
    %139 = vector.broadcast %cst_60 : f32 to vector<4x128xf32>
    %140 = arith.maximumf %138, %139 : vector<4x128xf32>
    %141 = arith.truncf %140 : vector<4x128xf32> to vector<4x128xbf16>
    %c1472 = arith.constant 1472 : index
    %c0_61 = arith.constant 0 : index
    %142 = vector.load %arg5[%c1472, %c0_61] : memref<1600x128xbf16, #tpu.memory_space<vmem>>, vector<128x128xbf16>
    %cst_62 = arith.constant dense<0.000000e+00> : vector<4x128xf32>
    %143 = tpu.matmul %141, %142, %cst_62 {dimension_numbers = #tpu.dot_dimension_numbers<[1], [0], [0], [1], [0, 0, 1, 1], [], []>} : vector<4x128xbf16>, vector<128x128xbf16>, vector<4x128xf32> -> vector<4x128xf32>
    %144 = vector.broadcast %4 : vector<1x128xf32> to vector<4x128xf32>
    %145 = arith.addf %143, %144 : vector<4x128xf32>
    %146 = vector.extract_strided_slice %145 {offsets = [0, 0], sizes = [4, 2], strides = [1, 1]} : vector<4x128xf32> to vector<4x2xf32>
    %c0_63 = arith.constant 0 : index
    %c0_64 = arith.constant 0 : index
    %147 = vector.load %arg8[%c0_63, %c0_64] : memref<4x2xf32, #tpu.memory_space<vmem>>, vector<4x2xf32>
    tpu.vector_store %arg8[%c0_63, %c0_64], %146 {strides = array<i32>} : memref<4x2xf32, #tpu.memory_space<vmem>>, vector<4x2xf32>,
    return
  }
}

</mosaic_0001>

<llo_original>
// kernel: prn_forward_eval.1
$region0: #{prn_forward_eval.1}
  #allocation0 [shape = 'u32[]', space=smem, size = 0x4, offset = 0x4, fixed_abs, tag = 'smem constant byte address 0x4 - core index']
  #allocation1 [shape = 'u32[144,128]{1,0:T(1,128)}', space=vmem, size = 0x12000, scoped, tag = 'internal scratch']
  %s0 = inlined_call_operand.vmem [shape: bf16[4,16,256], index: 0, kind: input, shape index: {}]
  %s1 = inlined_call_operand.vmem [shape: bf16[4,16,256], index: 1, kind: input, shape index: {}]
  %s2 = inlined_call_operand.vmem [shape: bf16[4,16,256], index: 2, kind: input, shape index: {}]
  %s3 = inlined_call_operand.vmem [shape: f32[4,8], index: 3, kind: input, shape index: {}]
  %s4 = inlined_call_operand.vmem [shape: f32[4,4,6], index: 4, kind: input, shape index: {}]
  %s5 = inlined_call_operand.vmem [shape: bf16[1600,128], index: 5, kind: input, shape index: {}]
  %s6 = inlined_call_operand.vmem [shape: f32[16,64], index: 6, kind: input, shape index: {}]
  %s7 = inlined_call_operand.vmem [shape: f32[1,1024], index: 7, kind: input, shape index: {}]
  %s8 = inlined_call_operand.vmem [shape: f32[4,2], index: 8, kind: output, shape index: {}]
  %s9 = sld [smem:[#allocation0]]
  $region42: #{prn_forward_eval.1} parent=0
    _
  %s11 = ssub.s32 1, %s9
  %s12 = scalar_select 0, %s11, %s9
  // Predicated region
  $region2: #{prn_forward_eval.1} parent=0 // pred_check
    _
  $region3: #{prn_forward_eval.1} parent=0 // pred_check_branch
    %14 = sbr.rel (0) target = $region5
  $region4: #{prn_forward_eval.1} parent=0 // pred_region
    _
  $region5: #{prn_forward_eval.1} parent=0 // pred_fallthru
    _
  // Predicated region
  $region6: #{prn_forward_eval.1} parent=0 // pred_check
    _
  $region7: #{prn_forward_eval.1} parent=0 // pred_check_branch
    %16 = sbr.rel (0) target = $region9
  $region8: #{prn_forward_eval.1} parent=0 // pred_region
    _
  $region9: #{prn_forward_eval.1} parent=0 // pred_fallthru
    _
  // Predicated region
  $region10: #{prn_forward_eval.1} parent=0 // pred_check
    _
  $region11: #{prn_forward_eval.1} parent=0 // pred_check_branch
    %18 = sbr.rel (0) target = $region13
  $region12: #{prn_forward_eval.1} parent=0 // pred_region
    _
  $region13: #{prn_forward_eval.1} parent=0 // pred_fallthru
    _
  // Predicated region
  $region14: #{prn_forward_eval.1} parent=0 // pred_check
    _
  $region15: #{prn_forward_eval.1} parent=0 // pred_check_branch
    %20 = sbr.rel (0) target = $region17
  $region16: #{prn_forward_eval.1} parent=0 // pred_region
    _
  $region17: #{prn_forward_eval.1} parent=0 // pred_fallthru
    _
  // Predicated region
  $region18: #{prn_forward_eval.1} parent=0 // pred_check
    _
  $region19: #{prn_forward_eval.1} parent=0 // pred_check_branch
    %22 = sbr.rel (0) target = $region21
  $region20: #{prn_forward_eval.1} parent=0 // pred_region
    _
  $region21: #{prn_forward_eval.1} parent=0 // pred_fallthru
    _
  // Predicated region
  $region22: #{prn_forward_eval.1} parent=0 // pred_check
    _
  $region23: #{prn_forward_eval.1} parent=0 // pred_check_branch
    %24 = sbr.rel (0) target = $region25
  $region24: #{prn_forward_eval.1} parent=0 // pred_region
    _
  $region25: #{prn_forward_eval.1} parent=0 // pred_fallthru
    _
  // Predicated region
  $region26: #{prn_forward_eval.1} parent=0 // pred_check
    _
  $region27: #{prn_forward_eval.1} parent=0 // pred_check_branch
    %26 = sbr.rel (0) target = $region29
  $region28: #{prn_forward_eval.1} parent=0 // pred_region
    _
  $region29: #{prn_forward_eval.1} parent=0 // pred_fallthru
    _
  // Predicated region
  $region30: #{prn_forward_eval.1} parent=0 // pred_check
    _
  $region31: #{prn_forward_eval.1} parent=0 // pred_check_branch
    %28 = sbr.rel (0) target = $region33
  $region32: #{prn_forward_eval.1} parent=0 // pred_region
    _
  $region33: #{prn_forward_eval.1} parent=0 // pred_fallthru
    _
  %v30 = vld [vmem:[%s7] sm:$0x1]
  %v31 = vld [vmem:[%s7 + $0x1] sm:$0x1]
  %v32 = vld [vmem:[%s7 + $0x2] sm:$0x1]
  %v33 = vld [vmem:[%s7 + $0x3] sm:$0x1]
  %v34 = vld [vmem:[%s7 + $0x4] sm:$0x1]
  %v35 = vld [vmem:[%s7 + $0x5] sm:$0x1]
  %v36 = vld [vmem:[%s7 + $0x6] sm:$0x1]
  %v37 = vld [vmem:[%s7 + $0x7] sm:$0x1]
  %v38 = vld [vmem:[%s0] sm:$0xff]
  %v39 = vld [vmem:[%s0 + $0x8] sm:$0xff]
  %v40 = vld [vmem:[%s0 + $0x10] sm:$0xff]
  %v41 = vld [vmem:[%s0 + $0x18] sm:$0xff]
  %v42 = vld [vmem:[%s0 + $0x20] sm:$0xff]
  %v43 = vld [vmem:[%s0 + $0x28] sm:$0xff]
  %v44 = vld [vmem:[%s0 + $0x30] sm:$0xff]
  %v45 = vld [vmem:[%s0 + $0x38] sm:$0xff]
  %v46 = vunpack.c.l.bf16 %v38
  %v47 = vunpack.c.h.bf16 %v38
  %v48 = vunpack.c.l.bf16 %v39
  %v49 = vunpack.c.h.bf16 %v39
  %v50 = vunpack.c.l.bf16 %v40
  %v51 = vunpack.c.h.bf16 %v40
  %v52 = vunpack.c.l.bf16 %v41
  %v53 = vunpack.c.h.bf16 %v41
  %v54 = vunpack.c.l.bf16 %v42
  %v55 = vunpack.c.h.bf16 %v42
  %v56 = vunpack.c.l.bf16 %v43
  %v57 = vunpack.c.h.bf16 %v43
  %v58 = vunpack.c.l.bf16 %v44
  %v59 = vunpack.c.h.bf16 %v44
  %v60 = vunpack.c.l.bf16 %v45
  %v61 = vunpack.c.h.bf16 %v45
  %v62 = vadd.f32 %v46, %v48
  %v63 = vrot.slane %v62, 4
  %v64 = vadd.f32 %v62, %v63
  %v65 = vrot.slane %v64, 2
  %v66 = vadd.f32 %v64, %v65
  %v67 = vrot.slane %v66, 1
  %v68 = vadd.f32 %v66, %v67
  %v69 = vadd.f32 %v47, %v49
  %v70 = vrot.slane %v69, 4
  %v71 = vadd.f32 %v69, %v70
  %v72 = vrot.slane %v71, 2
  %v73 = vadd.f32 %v71, %v72
  %v74 = vrot.slane %v73, 1
  %v75 = vadd.f32 %v73, %v74
  %v76 = vadd.f32 %v50, %v52
  %v77 = vrot.slane %v76, 4
  %v78 = vadd.f32 %v76, %v77
  %v79 = vrot.slane %v78, 2
  %v80 = vadd.f32 %v78, %v79
  %v81 = vrot.slane %v80, 1
  %v82 = vadd.f32 %v80, %v81
  %v83 = vadd.f32 %v51, %v53
  %v84 = vrot.slane %v83, 4
  %v85 = vadd.f32 %v83, %v84
  %v86 = vrot.slane %v85, 2
  %v87 = vadd.f32 %v85, %v86
  %v88 = vrot.slane %v87, 1
  %v89 = vadd.f32 %v87, %v88
  %v90 = vadd.f32 %v54, %v56
  %v91 = vrot.slane %v90, 4
  %v92 = vadd.f32 %v90, %v91
  %v93 = vrot.slane %v92, 2
  %v94 = vadd.f32 %v92, %v93
  %v95 = vrot.slane %v94, 1
  %v96 = vadd.f32 %v94, %v95
  %v97 = vadd.f32 %v55, %v57
  %v98 = vrot.slane %v97, 4
  %v99 = vadd.f32 %v97, %v98
  %v100 = vrot.slane %v99, 2
  %v101 = vadd.f32 %v99, %v100
  %v102 = vrot.slane %v101, 1
  %v103 = vadd.f32 %v101, %v102
  %v104 = vadd.f32 %v58, %v60
  %v105 = vrot.slane %v104, 4
  %v106 = vadd.f32 %v104, %v105
  %v107 = vrot.slane %v106, 2
  %v108 = vadd.f32 %v106, %v107
  %v109 = vrot.slane %v108, 1
  %v110 = vadd.f32 %v108, %v109
  %v111 = vadd.f32 %v59, %v61
  %v112 = vrot.slane %v111, 4
  %v113 = vadd.f32 %v111, %v112
  %v114 = vrot.slane %v113, 2
  %v115 = vadd.f32 %v113, %v114
  %v116 = vrot.slane %v115, 1
  %v117 = vadd.f32 %v115, %v116
  %v118 = vrcp.pop 16.0
  %v119 = vmul.f32 %v68, %v118
  %v120 = vmul.f32 %v75, %v118
  %v121 = vmul.f32 %v82, %v118
  %v122 = vmul.f32 %v89, %v118
  %v123 = vmul.f32 %v96, %v118
  %v124 = vmul.f32 %v103, %v118
  %v125 = vmul.f32 %v110, %v118
  %v126 = vmul.f32 %v117, %v118
  %v127 = vpack.c.bf16 %v119, %v119
  %v128 = vpack.c.bf16 %v120, %v120
  %v129 = vpack.c.bf16 %v121, %v121
  %v130 = vpack.c.bf16 %v122, %v122
  %v131 = vpack.c.bf16 %v123, %v123
  %v132 = vpack.c.bf16 %v124, %v124
  %v133 = vpack.c.bf16 %v125, %v125
  %v134 = vpack.c.bf16 %v126, %v126
  %v135 = vld [vmem:[%s1] sm:$0xff]
  %v136 = vld [vmem:[%s1 + $0x8] sm:$0xff]
  %v137 = vld [vmem:[%s1 + $0x10] sm:$0xff]
  %v138 = vld [vmem:[%s1 + $0x18] sm:$0xff]
  %v139 = vld [vmem:[%s1 + $0x20] sm:$0xff]
  %v140 = vld [vmem:[%s1 + $0x28] sm:$0xff]
  %v141 = vld [vmem:[%s1 + $0x30] sm:$0xff]
  %v142 = vld [vmem:[%s1 + $0x38] sm:$0xff]
  %v143 = vunpack.c.l.bf16 %v135
  %v144 = vunpack.c.h.bf16 %v135
  %v145 = vunpack.c.l.bf16 %v136
  %v146 = vunpack.c.h.bf16 %v136
  %v147 = vunpack.c.l.bf16 %v137
  %v148 = vunpack.c.h.bf16 %v137
  %v149 = vunpack.c.l.bf16 %v138
  %v150 = vunpack.c.h.bf16 %v138
  %v151 = vunpack.c.l.bf16 %v139
  %v152 = vunpack.c.h.bf16 %v139
  %v153 = vunpack.c.l.bf16 %v140
  %v154 = vunpack.c.h.bf16 %v140
  %v155 = vunpack.c.l.bf16 %v141
  %v156 = vunpack.c.h.bf16 %v141
  %v157 = vunpack.c.l.bf16 %v142
  %v158 = vunpack.c.h.bf16 %v142
  %v159 = vadd.f32 %v143, %v145
  %v160 = vrot.slane %v159, 4
  %v161 = vadd.f32 %v159, %v160
  %v162 = vrot.slane %v161, 2
  %v163 = vadd.f32 %v161, %v162
  %v164 = vrot.slane %v163, 1
  %v165 = vadd.f32 %v163, %v164
  %v166 = vadd.f32 %v144, %v146
  %v167 = vrot.slane %v166, 4
  %v168 = vadd.f32 %v166, %v167
  %v169 = vrot.slane %v168, 2
  %v170 = vadd.f32 %v168, %v169
  %v171 = vrot.slane %v170, 1
  %v172 = vadd.f32 %v170, %v171
  %v173 = vadd.f32 %v147, %v149
  %v174 = vrot.slane %v173, 4
  %v175 = vadd.f32 %v173, %v174
  %v176 = vrot.slane %v175, 2
  %v177 = vadd.f32 %v175, %v176
  %v178 = vrot.slane %v177, 1
  %v179 = vadd.f32 %v177, %v178
  %v180 = vadd.f32 %v148, %v150
  %v181 = vrot.slane %v180, 4
  %v182 = vadd.f32 %v180, %v181
  %v183 = vrot.slane %v182, 2
  %v184 = vadd.f32 %v182, %v183
  %v185 = vrot.slane %v184, 1
  %v186 = vadd.f32 %v184, %v185
  %v187 = vadd.f32 %v151, %v153
  %v188 = vrot.slane %v187, 4
  %v189 = vadd.f32 %v187, %v188
  %v190 = vrot.slane %v189, 2
  %v191 = vadd.f32 %v189, %v190
  %v192 = vrot.slane %v191, 1
  %v193 = vadd.f32 %v191, %v192
  %v194 = vadd.f32 %v152, %v154
  %v195 = vrot.slane %v194, 4
  %v196 = vadd.f32 %v194, %v195
  %v197 = vrot.slane %v196, 2
  %v198 = vadd.f32 %v196, %v197
  %v199 = vrot.slane %v198, 1
  %v200 = vadd.f32 %v198, %v199
  %v201 = vadd.f32 %v155, %v157
  %v202 = vrot.slane %v201, 4
  %v203 = vadd.f32 %v201, %v202
  %v204 = vrot.slane %v203, 2
  %v205 = vadd.f32 %v203, %v204
  %v206 = vrot.slane %v205, 1
  %v207 = vadd.f32 %v205, %v206
  %v208 = vadd.f32 %v156, %v158
  %v209 = vrot.slane %v208, 4
  %v210 = vadd.f32 %v208, %v209
  %v211 = vrot.slane %v210, 2
  %v212 = vadd.f32 %v210, %v211
  %v213 = vrot.slane %v212, 1
  %v214 = vadd.f32 %v212, %v213
  %v215 = vmul.f32 %v165, %v118
  %v216 = vmul.f32 %v172, %v118
  %v217 = vmul.f32 %v179, %v118
  %v218 = vmul.f32 %v186, %v118
  %v219 = vmul.f32 %v193, %v118
  %v220 = vmul.f32 %v200, %v118
  %v221 = vmul.f32 %v207, %v118
  %v222 = vmul.f32 %v214, %v118
  %v223 = vpack.c.bf16 %v215, %v215
  %v224 = vpack.c.bf16 %v216, %v216
  %v225 = vpack.c.bf16 %v217, %v217
  %v226 = vpack.c.bf16 %v218, %v218
  %v227 = vpack.c.bf16 %v219, %v219
  %v228 = vpack.c.bf16 %v220, %v220
  %v229 = vpack.c.bf16 %v221, %v221
  %v230 = vpack.c.bf16 %v222, %v222
  %v231 = vld [vmem:[%s2] sm:$0xff]
  %v232 = vld [vmem:[%s2 + $0x8] sm:$0xff]
  %v233 = vld [vmem:[%s2 + $0x10] sm:$0xff]
  %v234 = vld [vmem:[%s2 + $0x18] sm:$0xff]
  %v235 = vld [vmem:[%s2 + $0x20] sm:$0xff]
  %v236 = vld [vmem:[%s2 + $0x28] sm:$0xff]
  %v237 = vld [vmem:[%s2 + $0x30] sm:$0xff]
  %v238 = vld [vmem:[%s2 + $0x38] sm:$0xff]
  %v239 = vunpack.c.l.bf16 %v231
  %v240 = vunpack.c.h.bf16 %v231
  %v241 = vunpack.c.l.bf16 %v232
  %v242 = vunpack.c.h.bf16 %v232
  %v243 = vunpack.c.l.bf16 %v233
  %v244 = vunpack.c.h.bf16 %v233
  %v245 = vunpack.c.l.bf16 %v234
  %v246 = vunpack.c.h.bf16 %v234
  %v247 = vunpack.c.l.bf16 %v235
  %v248 = vunpack.c.h.bf16 %v235
  %v249 = vunpack.c.l.bf16 %v236
  %v250 = vunpack.c.h.bf16 %v236
  %v251 = vunpack.c.l.bf16 %v237
  %v252 = vunpack.c.h.bf16 %v237
  %v253 = vunpack.c.l.bf16 %v238
  %v254 = vunpack.c.h.bf16 %v238
  %v255 = vadd.f32 %v239, %v241
  %v256 = vrot.slane %v255, 4
  %v257 = vadd.f32 %v255, %v256
  %v258 = vrot.slane %v257, 2
  %v259 = vadd.f32 %v257, %v258
  %v260 = vrot.slane %v259, 1
  %v261 = vadd.f32 %v259, %v260
  %v262 = vadd.f32 %v240, %v242
  %v263 = vrot.slane %v262, 4
  %v264 = vadd.f32 %v262, %v263
  %v265 = vrot.slane %v264, 2
  %v266 = vadd.f32 %v264, %v265
  %v267 = vrot.slane %v266, 1
  %v268 = vadd.f32 %v266, %v267
  %v269 = vadd.f32 %v243, %v245
  %v270 = vrot.slane %v269, 4
  %v271 = vadd.f32 %v269, %v270
  %v272 = vrot.slane %v271, 2
  %v273 = vadd.f32 %v271, %v272
  %v274 = vrot.slane %v273, 1
  %v275 = vadd.f32 %v273, %v274
  %v276 = vadd.f32 %v244, %v246
  %v277 = vrot.slane %v276, 4
  %v278 = vadd.f32 %v276, %v277
  %v279 = vrot.slane %v278, 2
  %v280 = vadd.f32 %v278, %v279
  %v281 = vrot.slane %v280, 1
  %v282 = vadd.f32 %v280, %v281
  %v283 = vadd.f32 %v247, %v249
  %v284 = vrot.slane %v283, 4
  %v285 = vadd.f32 %v283, %v284
  %v286 = vrot.slane %v285, 2
  %v287 = vadd.f32 %v285, %v286
  %v288 = vrot.slane %v287, 1
  %v289 = vadd.f32 %v287, %v288
  %v290 = vadd.f32 %v248, %v250
  %v291 = vrot.slane %v290, 4
  %v292 = vadd.f32 %v290, %v291
  %v293 = vrot.slane %v292, 2
  %v294 = vadd.f32 %v292, %v293
  %v295 = vrot.slane %v294, 1
  %v296 = vadd.f32 %v294, %v295
  %v297 = vadd.f32 %v251, %v253
  %v298 = vrot.slane %v297, 4
  %v299 = vadd.f32 %v297, %v298
  %v300 = vrot.slane %v299, 2
  %v301 = vadd.f32 %v299, %v300
  %v302 = vrot.slane %v301, 1
  %v303 = vadd.f32 %v301, %v302
  %v304 = vadd.f32 %v252, %v254
  %v305 = vrot.slane %v304, 4
  %v306 = vadd.f32 %v304, %v305
  %v307 = vrot.slane %v306, 2
  %v308 = vadd.f32 %v306, %v307
  %v309 = vrot.slane %v308, 1
  %v310 = vadd.f32 %v308, %v309
  %v311 = vmul.f32 %v261, %v118
  %v312 = vmul.f32 %v268, %v118
  %v313 = vmul.f32 %v275, %v118
  %v314 = vmul.f32 %v282, %v118
  %v315 = vmul.f32 %v289, %v118
  %v316 = vmul.f32 %v296, %v118
  %v317 = vmul.f32 %v303, %v118
  %v318 = vmul.f32 %v310, %v118
  %v319 = vpack.c.bf16 %v311, %v311
  %v320 = vpack.c.bf16 %v312, %v312
  %v321 = vpack.c.bf16 %v313, %v313
  %v322 = vpack.c.bf16 %v314, %v314
  %v323 = vpack.c.bf16 %v315, %v315
  %v324 = vpack.c.bf16 %v316, %v316
  %v325 = vpack.c.bf16 %v317, %v317
  %v326 = vpack.c.bf16 %v318, %v318
  %v327 = vld [vmem:[%s5] sm:$0xf]
  %v328 = vld [vmem:[%s5 + $0x4] sm:$0xf]
  %v329 = vld [vmem:[%s5 + $0x8] sm:$0xf]
  %v330 = vld [vmem:[%s5 + $0xc] sm:$0xf]
  %v331 = vld [vmem:[%s5 + $0x10] sm:$0xf]
  %v332 = vld [vmem:[%s5 + $0x14] sm:$0xf]
  %v333 = vld [vmem:[%s5 + $0x18] sm:$0xf]
  %v334 = vld [vmem:[%s5 + $0x1c] sm:$0xf]
  %v335 = vld [vmem:[%s5 + $0x20] sm:$0xf]
  %v336 = vld [vmem:[%s5 + $0x24] sm:$0xf]
  %v337 = vld [vmem:[%s5 + $0x28] sm:$0xf]
  %v338 = vld [vmem:[%s5 + $0x2c] sm:$0xf]
  %v339 = vld [vmem:[%s5 + $0x30] sm:$0xf]
  %v340 = vld [vmem:[%s5 + $0x34] sm:$0xf]
  %v341 = vld [vmem:[%s5 + $0x38] sm:$0xf]
  %v342 = vld [vmem:[%s5 + $0x3c] sm:$0xf]
  %v343 = vld [vmem:[%s5 + $0x40] sm:$0xf]
  %v344 = vld [vmem:[%s5 + $0x44] sm:$0xf]
  %v345 = vld [vmem:[%s5 + $0x48] sm:$0xf]
  %v346 = vld [vmem:[%s5 + $0x4c] sm:$0xf]
  %v347 = vld [vmem:[%s5 + $0x50] sm:$0xf]
  %v348 = vld [vmem:[%s5 + $0x54] sm:$0xf]
  %v349 = vld [vmem:[%s5 + $0x58] sm:$0xf]
  %v350 = vld [vmem:[%s5 + $0x5c] sm:$0xf]
  %v351 = vld [vmem:[%s5 + $0x60] sm:$0xf]
  %v352 = vld [vmem:[%s5 + $0x64] sm:$0xf]
  %v353 = vld [vmem:[%s5 + $0x68] sm:$0xf]
  %v354 = vld [vmem:[%s5 + $0x6c] sm:$0xf]
  %v355 = vld [vmem:[%s5 + $0x70] sm:$0xf]
  %v356 = vld [vmem:[%s5 + $0x74] sm:$0xf]
  %v357 = vld [vmem:[%s5 + $0x78] sm:$0xf]
  %v358 = vld [vmem:[%s5 + $0x7c] sm:$0xf]
  %v360 = vlaneseq
  %v361 = vshrl.u32 %v360, 7
  %v362 = vsub.s32 0, %v361
  %v363 = vrot.slane %v30, %v362
  %v373 = vunpack.c.l.b16 %v127
  %v374 = vunpack.c.l.b16 %v128
  %v375 = vunpack.c.l.b16 %v129
  %v376 = vunpack.c.l.b16 %v130
  %v377 = vunpack.c.l.b16 %v131
  %v378 = vunpack.c.l.b16 %v132
  %v379 = vunpack.c.l.b16 %v133
  %v380 = vunpack.c.l.b16 %v134
  %vm381 = vcmask 1041409
  %v382 = vsel %vm381, %v375, %v373
  %vm383 = vcmask 1042434
  %v384 = vsel %vm383, %v377, %v382
  %vm385 = vcmask 1043459
  %v386 = vsel %vm385, %v379, %v384
  %v387 = vsel %vm381, %v376, %v374
  %v388 = vsel %vm383, %v378, %v387
  %v389 = vsel %vm385, %v380, %v388
  %v390 = vpack.c.b16 %v386, %v386
  %v391 = vpack.c.b16 %v389, %v389
  %v426 = vunpack.c.l.b16 %v327
  %v427 = vunpack.c.l.b16 %v328
  %v428 = vunpack.c.l.b16 %v329
  %v429 = vunpack.c.l.b16 %v330
  %v430 = vunpack.c.l.b16 %v331
  %v431 = vunpack.c.l.b16 %v332
  %v432 = vunpack.c.l.b16 %v333
  %v433 = vunpack.c.l.b16 %v334
  %v434 = vunpack.c.l.b16 %v335
  %v435 = vunpack.c.l.b16 %v336
  %v436 = vunpack.c.l.b16 %v337
  %v437 = vunpack.c.l.b16 %v338
  %v438 = vunpack.c.l.b16 %v339
  %v439 = vunpack.c.l.b16 %v340
  %v440 = vunpack.c.l.b16 %v341
  %v441 = vunpack.c.l.b16 %v342
  %v442 = vunpack.c.l.b16 %v343
  %v443 = vunpack.c.l.b16 %v344
  %v444 = vunpack.c.l.b16 %v345
  %v445 = vunpack.c.l.b16 %v346
  %v446 = vunpack.c.l.b16 %v347
  %v447 = vunpack.c.l.b16 %v348
  %v448 = vunpack.c.l.b16 %v349
  %v449 = vunpack.c.l.b16 %v350
  %v450 = vunpack.c.l.b16 %v351
  %v451 = vunpack.c.l.b16 %v352
  %v452 = vunpack.c.l.b16 %v353
  %v453 = vunpack.c.l.b16 %v354
  %v454 = vunpack.c.l.b16 %v355
  %v455 = vunpack.c.l.b16 %v356
  %v456 = vunpack.c.l.b16 %v357
  %v457 = vunpack.c.l.b16 %v358
  %v458 = vpack.c.b16 %v427, %v426
  %v459 = vpack.c.b16 %v429, %v428
  %v460 = vpack.c.b16 %v431, %v430
  %v461 = vpack.c.b16 %v433, %v432
  %v462 = vpack.c.b16 %v435, %v434
  %v463 = vpack.c.b16 %v437, %v436
  %v464 = vpack.c.b16 %v439, %v438
  %v465 = vpack.c.b16 %v441, %v440
  %v466 = vpack.c.b16 %v443, %v442
  %v467 = vpack.c.b16 %v445, %v444
  %v468 = vpack.c.b16 %v447, %v446
  %v469 = vpack.c.b16 %v449, %v448
  %v470 = vpack.c.b16 %v451, %v450
  %v471 = vpack.c.b16 %v453, %v452
  %v472 = vpack.c.b16 %v455, %v454
  %v473 = vpack.c.b16 %v457, %v456
  %490 = vmatprep.subr.bf16.mxu0 0
  %491 = vmatpush1.bf16.msra.mxu0 %v458
  %492 = vmatprep.subr.bf16.mxu0 0
  %493 = vmatpush1.bf16.msra.mxu0 %v459
  %494 = vmatprep.subr.bf16.mxu0 0
  %495 = vmatpush1.bf16.msra.mxu0 %v460
  %496 = vmatprep.subr.bf16.mxu0 0
  %497 = vmatpush1.bf16.msra.mxu0 %v461
  %498 = vmatprep.subr.bf16.mxu0 0
  %499 = vmatpush1.bf16.msra.mxu0 %v462
  %500 = vmatprep.subr.bf16.mxu0 0
  %501 = vmatpush1.bf16.msra.mxu0 %v463
  %502 = vmatprep.subr.bf16.mxu0 0
  %503 = vmatpush1.bf16.msra.mxu0 %v464
  %504 = vmatprep.subr.bf16.mxu0 0
  %505 = vmatpush1.bf16.msra.mxu0 %v465
  %506 = vmatprep.subr.bf16.mxu0 0
  %507 = vmatpush1.bf16.msra.mxu0 %v466
  %508 = vmatprep.subr.bf16.mxu0 0
  %509 = vmatpush1.bf16.msra.mxu0 %v467
  %510 = vmatprep.subr.bf16.mxu0 0
  %511 = vmatpush1.bf16.msra.mxu0 %v468
  %512 = vmatprep.subr.bf16.mxu0 0
  %513 = vmatpush1.bf16.msra.mxu0 %v469
  %514 = vmatprep.subr.bf16.mxu0 0
  %515 = vmatpush1.bf16.msra.mxu0 %v470
  %516 = vmatprep.subr.bf16.mxu0 0
  %517 = vmatpush1.bf16.msra.mxu0 %v471
  %518 = vmatprep.subr.bf16.mxu0 0
  %519 = vmatpush1.bf16.msra.mxu0 %v472
  %520 = vmatprep.subr.bf16.mxu0 0
  %521 = vmatpush1.bf16.msra.mxu0 %v473
  %522 = vmatprep.mubr.bf16.mxu0 %v391
  %523 = vmatmul.mubr.bf16.gmra.mrb[0].mxu0 %v390
  %v524 = vpop.f32.mrb[0].mxu0
  %v525 = vadd.f32 %v363, %v524
  %v526 = vpop.f32.mrb[0].mxu0
  %v527 = vpop.f32.mrb[0].mxu0
  %v528 = vpop.f32.mrb[0].mxu0
  %529 = vdwg.mxu0
  %v530 = vld [vmem:[%s5 + $0x80] sm:$0xf]
  %v531 = vld [vmem:[%s5 + $0x84] sm:$0xf]
  %v532 = vld [vmem:[%s5 + $0x88] sm:$0xf]
  %v533 = vld [vmem:[%s5 + $0x8c] sm:$0xf]
  %v534 = vld [vmem:[%s5 + $0x90] sm:$0xf]
  %v535 = vld [vmem:[%s5 + $0x94] sm:$0xf]
  %v536 = vld [vmem:[%s5 + $0x98] sm:$0xf]
  %v537 = vld [vmem:[%s5 + $0x9c] sm:$0xf]
  %v538 = vld [vmem:[%s5 + $0xa0] sm:$0xf]
  %v539 = vld [vmem:[%s5 + $0xa4] sm:$0xf]
  %v540 = vld [vmem:[%s5 + $0xa8] sm:$0xf]
  %v541 = vld [vmem:[%s5 + $0xac] sm:$0xf]
  %v542 = vld [vmem:[%s5 + $0xb0] sm:$0xf]
  %v543 = vld [vmem:[%s5 + $0xb4] sm:$0xf]
  %v544 = vld [vmem:[%s5 + $0xb8] sm:$0xf]
  %v545 = vld [vmem:[%s5 + $0xbc] sm:$0xf]
  %v546 = vld [vmem:[%s5 + $0xc0] sm:$0xf]
  %v547 = vld [vmem:[%s5 + $0xc4] sm:$0xf]
  %v548 = vld [vmem:[%s5 + $0xc8] sm:$0xf]
  %v549 = vld [vmem:[%s5 + $0xcc] sm:$0xf]
  %v550 = vld [vmem:[%s5 + $0xd0] sm:$0xf]
  %v551 = vld [vmem:[%s5 + $0xd4] sm:$0xf]
  %v552 = vld [vmem:[%s5 + $0xd8] sm:$0xf]
  %v553 = vld [vmem:[%s5 + $0xdc] sm:$0xf]
  %v554 = vld [vmem:[%s5 + $0xe0] sm:$0xf]
  %v555 = vld [vmem:[%s5 + $0xe4] sm:$0xf]
  %v556 = vld [vmem:[%s5 + $0xe8] sm:$0xf]
  %v557 = vld [vmem:[%s5 + $0xec] sm:$0xf]
  %v558 = vld [vmem:[%s5 + $0xf0] sm:$0xf]
  %v559 = vld [vmem:[%s5 + $0xf4] sm:$0xf]
  %v560 = vld [vmem:[%s5 + $0xf8] sm:$0xf]
  %v561 = vld [vmem:[%s5 + $0xfc] sm:$0xf]
  %v563 = vlaneseq
  %v564 = vshrl.u32 %v563, 7
  %v565 = vsub.s32 0, %v564
  %v566 = vrot.slane %v31, %v565
  %v576 = vunpack.c.l.b16 %v223
  %v577 = vunpack.c.l.b16 %v224
  %v578 = vunpack.c.l.b16 %v225
  %v579 = vunpack.c.l.b16 %v226
  %v580 = vunpack.c.l.b16 %v227
  %v581 = vunpack.c.l.b16 %v228
  %v582 = vunpack.c.l.b16 %v229
  %v583 = vunpack.c.l.b16 %v230
  %v584 = vsel %vm381, %v578, %v576
  %v585 = vsel %vm383, %v580, %v584
  %v586 = vsel %vm385, %v582, %v585
  %v587 = vsel %vm381, %v579, %v577
  %v588 = vsel %vm383, %v581, %v587
  %v589 = vsel %vm385, %v583, %v588
  %v590 = vpack.c.b16 %v586, %v586
  %v591 = vpack.c.b16 %v589, %v589
  %v626 = vunpack.c.l.b16 %v530
  %v627 = vunpack.c.l.b16 %v531
  %v628 = vunpack.c.l.b16 %v532
  %v629 = vunpack.c.l.b16 %v533
  %v630 = vunpack.c.l.b16 %v534
  %v631 = vunpack.c.l.b16 %v535
  %v632 = vunpack.c.l.b16 %v536
  %v633 = vunpack.c.l.b16 %v537
  %v634 = vunpack.c.l.b16 %v538
  %v635 = vunpack.c.l.b16 %v539
  %v636 = vunpack.c.l.b16 %v540
  %v637 = vunpack.c.l.b16 %v541
  %v638 = vunpack.c.l.b16 %v542
  %v639 = vunpack.c.l.b16 %v543
  %v640 = vunpack.c.l.b16 %v544
  %v641 = vunpack.c.l.b16 %v545
  %v642 = vunpack.c.l.b16 %v546
  %v643 = vunpack.c.l.b16 %v547
  %v644 = vunpack.c.l.b16 %v548
  %v645 = vunpack.c.l.b16 %v549
  %v646 = vunpack.c.l.b16 %v550
  %v647 = vunpack.c.l.b16 %v551
  %v648 = vunpack.c.l.b16 %v552
  %v649 = vunpack.c.l.b16 %v553
  %v650 = vunpack.c.l.b16 %v554
  %v651 = vunpack.c.l.b16 %v555
  %v652 = vunpack.c.l.b16 %v556
  %v653 = vunpack.c.l.b16 %v557
  %v654 = vunpack.c.l.b16 %v558
  %v655 = vunpack.c.l.b16 %v559
  %v656 = vunpack.c.l.b16 %v560
  %v657 = vunpack.c.l.b16 %v561
  %v658 = vpack.c.b16 %v627, %v626
  %v659 = vpack.c.b16 %v629, %v628
  %v660 = vpack.c.b16 %v631, %v630
  %v661 = vpack.c.b16 %v633, %v632
  %v662 = vpack.c.b16 %v635, %v634
  %v663 = vpack.c.b16 %v637, %v636
  %v664 = vpack.c.b16 %v639, %v638
  %v665 = vpack.c.b16 %v641, %v640
  %v666 = vpack.c.b16 %v643, %v642
  %v667 = vpack.c.b16 %v645, %v644
  %v668 = vpack.c.b16 %v647, %v646
  %v669 = vpack.c.b16 %v649, %v648
  %v670 = vpack.c.b16 %v651, %v650
  %v671 = vpack.c.b16 %v653, %v652
  %v672 = vpack.c.b16 %v655, %v654
  %v673 = vpack.c.b16 %v657, %v656
  %690 = vmatprep.subr.bf16.mxu0 0
  %691 = vmatpush1.bf16.msra.mxu0 %v658
  %692 = vmatprep.subr.bf16.mxu0 0
  %693 = vmatpush1.bf16.msra.mxu0 %v659
  %694 = vmatprep.subr.bf16.mxu0 0
  %695 = vmatpush1.bf16.msra.mxu0 %v660
  %696 = vmatprep.subr.bf16.mxu0 0
  %697 = vmatpush1.bf16.msra.mxu0 %v661
  %698 = vmatprep.subr.bf16.mxu0 0
  %699 = vmatpush1.bf16.msra.mxu0 %v662
  %700 = vmatprep.subr.bf16.mxu0 0
  %701 = vmatpush1.bf16.msra.mxu0 %v663
  %702 = vmatprep.subr.bf16.mxu0 0
  %703 = vmatpush1.bf16.msra.mxu0 %v664
  %704 = vmatprep.subr.bf16.mxu0 0
  %705 = vmatpush1.bf16.msra.mxu0 %v665
  %706 = vmatprep.subr.bf16.mxu0 0
  %707 = vmatpush1.bf16.msra.mxu0 %v666
  %708 = vmatprep.subr.bf16.mxu0 0
  %709 = vmatpush1.bf16.msra.mxu0 %v667
  %710 = vmatprep.subr.bf16.mxu0 0
  %711 = vmatpush1.bf16.msra.mxu0 %v668
  %712 = vmatprep.subr.bf16.mxu0 0
  %713 = vmatpush1.bf16.msra.mxu0 %v669
  %714 = vmatprep.subr.bf16.mxu0 0
  %715 = vmatpush1.bf16.msra.mxu0 %v670
  %716 = vmatprep.subr.bf16.mxu0 0
  %717 = vmatpush1.bf16.msra.mxu0 %v671
  %718 = vmatprep.subr.bf16.mxu0 0
  %719 = vmatpush1.bf16.msra.mxu0 %v672
  %720 = vmatprep.subr.bf16.mxu0 0
  %721 = vmatpush1.bf16.msra.mxu0 %v673
  %722 = vmatprep.mubr.bf16.mxu0 %v591
  %723 = vmatmul.mubr.bf16.gmra.mrb[0].mxu0 %v590
  %v724 = vpop.f32.mrb[0].mxu0
  %v725 = vadd.f32 %v566, %v724
  %v726 = vpop.f32.mrb[0].mxu0
  %v727 = vpop.f32.mrb[0].mxu0
  %v728 = vpop.f32.mrb[0].mxu0
  %729 = vdwg.mxu0
  %v730 = vld [vmem:[%s3] sm:$0xf]
  %v731 = vld [vmem:[%s6] sm:$0xff]
  %v733 = vlaneseq
  %v734 = vshrl.u32 %v733, 7
  %v735 = vsub.s32 0, %v734
  %v736 = vrot.slane %v35, %v735
  %vm738 = vcmask 64512
  %v740 = vsel %vm738, %v730, 0
  %742 = vmatprep.subr.mxu0 0.0
  %743 = vmatpush1.msra.mxu0 %v731
  %744 = vmatprep.subr.mxu0 0.0
  %745 = vmatpush1.msra.mxu0 0.0
  %746 = vmatprep.subr.mxu0 0.0
  %747 = vmatpush1.msra.mxu0 0.0
  %748 = vmatprep.subr.mxu0 0.0
  %749 = vmatpush1.msra.mxu0 0.0
  %750 = vmatprep.subr.mxu0 0.0
  %751 = vmatpush1.msra.mxu0 0.0
  %752 = vmatprep.subr.mxu0 0.0
  %753 = vmatpush1.msra.mxu0 0.0
  %754 = vmatprep.subr.mxu0 0.0
  %755 = vmatpush1.msra.mxu0 0.0
  %756 = vmatprep.subr.mxu0 0.0
  %757 = vmatpush1.msra.mxu0 0.0
  %758 = vmatprep.subr.mxu0 0.0
  %759 = vmatpush1.msra.mxu0 0.0
  %760 = vmatprep.subr.mxu0 0.0
  %761 = vmatpush1.msra.mxu0 0.0
  %762 = vmatprep.subr.mxu0 0.0
  %763 = vmatpush1.msra.mxu0 0.0
  %764 = vmatprep.subr.mxu0 0.0
  %765 = vmatpush1.msra.mxu0 0.0
  %766 = vmatprep.subr.mxu0 0.0
  %767 = vmatpush1.msra.mxu0 0.0
  %768 = vmatprep.subr.mxu0 0.0
  %769 = vmatpush1.msra.mxu0 0.0
  %770 = vmatprep.subr.mxu0 0.0
  %771 = vmatpush1.msra.mxu0 0.0
  %772 = vmatprep.subr.mxu0 0.0
  %773 = vmatpush1.msra.mxu0 0.0
  %774 = vmatprep.subr.mxu0 0.0
  %775 = vmatpush1.msra.mxu0 0.0
  %776 = vmatprep.subr.mxu0 0.0
  %777 = vmatpush1.msra.mxu0 0.0
  %778 = vmatprep.subr.mxu0 0.0
  %779 = vmatpush1.msra.mxu0 0.0
  %780 = vmatprep.subr.mxu0 0.0
  %781 = vmatpush1.msra.mxu0 0.0
  %782 = vmatprep.subr.mxu0 0.0
  %783 = vmatpush1.msra.mxu0 0.0
  %784 = vmatprep.subr.mxu0 0.0
  %785 = vmatpush1.msra.mxu0 0.0
  %786 = vmatprep.subr.mxu0 0.0
  %787 = vmatpush1.msra.mxu0 0.0
  %788 = vmatprep.subr.mxu0 0.0
  %789 = vmatpush1.msra.mxu0 0.0
  %790 = vmatprep.subr.mxu0 0.0
  %791 = vmatpush1.msra.mxu0 0.0
  %792 = vmatprep.subr.mxu0 0.0
  %793 = vmatpush1.msra.mxu0 0.0
  %794 = vmatprep.subr.mxu0 0.0
  %795 = vmatpush1.msra.mxu0 0.0
  %796 = vmatprep.subr.mxu0 0.0
  %797 = vmatpush1.msra.mxu0 0.0
  %798 = vmatprep.subr.mxu0 0.0
  %799 = vmatpush1.msra.mxu0 0.0
  %800 = vmatprep.subr.mxu0 0.0
  %801 = vmatpush1.msra.mxu0 0.0
  %802 = vmatprep.subr.mxu0 0.0
  %803 = vmatpush1.msra.mxu0 0.0
  %804 = vmatprep.subr.mxu0 0.0
  %805 = vmatpush1.msra.mxu0 0.0
  %806 = vmatprep.mubr.f32.mxu0 0.0
  %807 = vmatmul.mubr.f32.gmra.mrb[0].mxu0 %v740
  %v808 = vpop.f32.mrb[0].mxu0
  %v809 = vadd.f32 %v736, %v808
  %v810 = vpop.f32.mrb[0].mxu0
  %811 = vdwg.mxu0
  %v812 = vmax.f32 %v809, 0.0
  %v813 = vld [vmem:[%s5 + $0x100] sm:$0xf]
  %v814 = vld [vmem:[%s5 + $0x104] sm:$0xf]
  %v815 = vld [vmem:[%s5 + $0x108] sm:$0xf]
  %v816 = vld [vmem:[%s5 + $0x10c] sm:$0xf]
  %v817 = vld [vmem:[%s5 + $0x110] sm:$0xf]
  %v818 = vld [vmem:[%s5 + $0x114] sm:$0xf]
  %v819 = vld [vmem:[%s5 + $0x118] sm:$0xf]
  %v820 = vld [vmem:[%s5 + $0x11c] sm:$0xf]
  %v821 = vld [vmem:[%s5 + $0x120] sm:$0xf]
  %v822 = vld [vmem:[%s5 + $0x124] sm:$0xf]
  %v823 = vld [vmem:[%s5 + $0x128] sm:$0xf]
  %v824 = vld [vmem:[%s5 + $0x12c] sm:$0xf]
  %v825 = vld [vmem:[%s5 + $0x130] sm:$0xf]
  %v826 = vld [vmem:[%s5 + $0x134] sm:$0xf]
  %v827 = vld [vmem:[%s5 + $0x138] sm:$0xf]
  %v828 = vld [vmem:[%s5 + $0x13c] sm:$0xf]
  %v829 = vld [vmem:[%s5 + $0x140] sm:$0xf]
  %v830 = vld [vmem:[%s5 + $0x144] sm:$0xf]
  %v831 = vld [vmem:[%s5 + $0x148] sm:$0xf]
  %v832 = vld [vmem:[%s5 + $0x14c] sm:$0xf]
  %v833 = vld [vmem:[%s5 + $0x150] sm:$0xf]
  %v834 = vld [vmem:[%s5 + $0x154] sm:$0xf]
  %v835 = vld [vmem:[%s5 + $0x158] sm:$0xf]
  %v836 = vld [vmem:[%s5 + $0x15c] sm:$0xf]
  %v837 = vld [vmem:[%s5 + $0x160] sm:$0xf]
  %v838 = vld [vmem:[%s5 + $0x164] sm:$0xf]
  %v839 = vld [vmem:[%s5 + $0x168] sm:$0xf]
  %v840 = vld [vmem:[%s5 + $0x16c] sm:$0xf]
  %v841 = vld [vmem:[%s5 + $0x170] sm:$0xf]
  %v842 = vld [vmem:[%s5 + $0x174] sm:$0xf]
  %v843 = vld [vmem:[%s5 + $0x178] sm:$0xf]
  %v844 = vld [vmem:[%s5 + $0x17c] sm:$0xf]
  %v845 = vpack.c.bf16 %v812, %v812
  %v846 = vld [vmem:[%s5 + $0x180] sm:$0xf]
  %v847 = vld [vmem:[%s5 + $0x184] sm:$0xf]
  %v848 = vld [vmem:[%s5 + $0x188] sm:$0xf]
  %v849 = vld [vmem:[%s5 + $0x18c] sm:$0xf]
  %v850 = vld [vmem:[%s5 + $0x190] sm:$0xf]
  %v851 = vld [vmem:[%s5 + $0x194] sm:$0xf]
  %v852 = vld [vmem:[%s5 + $0x198] sm:$0xf]
  %v853 = vld [vmem:[%s5 + $0x19c] sm:$0xf]
  %v862 = vunpack.c.l.b16 %v846
  %v863 = vunpack.c.l.b16 %v847
  %v864 = vunpack.c.l.b16 %v848
  %v865 = vunpack.c.l.b16 %v849
  %v866 = vunpack.c.l.b16 %v850
  %v867 = vunpack.c.l.b16 %v851
  %v868 = vunpack.c.l.b16 %v852
  %v869 = vunpack.c.l.b16 %v853
  %v870 = vpack.c.b16 %v863, %v862
  %v871 = vpack.c.b16 %v865, %v864
  %v872 = vpack.c.b16 %v867, %v866
  %v873 = vpack.c.b16 %v869, %v868
  %vm878 = vcmask 523264
  %v880 = vsel %vm878, %v845, 0
  %882 = vmatprep.subr.bf16.mxu0 0
  %883 = vmatpush1.bf16.msra.mxu0 %v870
  %884 = vmatprep.subr.bf16.mxu0 0
  %885 = vmatpush1.bf16.msra.mxu0 %v871
  %886 = vmatprep.subr.bf16.mxu0 0
  %887 = vmatpush1.bf16.msra.mxu0 %v872
  %888 = vmatprep.subr.bf16.mxu0 0
  %889 = vmatpush1.bf16.msra.mxu0 %v873
  %890 = vmatprep.subr.bf16.mxu0 0
  %891 = vmatpush1.bf16.msra.mxu0 0
  %892 = vmatprep.subr.bf16.mxu0 0
  %893 = vmatpush1.bf16.msra.mxu0 0
  %894 = vmatprep.subr.bf16.mxu0 0
  %895 = vmatpush1.bf16.msra.mxu0 0
  %896 = vmatprep.subr.bf16.mxu0 0
  %897 = vmatpush1.bf16.msra.mxu0 0
  %898 = vmatprep.subr.bf16.mxu0 0
  %899 = vmatpush1.bf16.msra.mxu0 0
  %900 = vmatprep.subr.bf16.mxu0 0
  %901 = vmatpush1.bf16.msra.mxu0 0
  %902 = vmatprep.subr.bf16.mxu0 0
  %903 = vmatpush1.bf16.msra.mxu0 0
  %904 = vmatprep.subr.bf16.mxu0 0
  %905 = vmatpush1.bf16.msra.mxu0 0
  %906 = vmatprep.subr.bf16.mxu0 0
  %907 = vmatpush1.bf16.msra.mxu0 0
  %908 = vmatprep.subr.bf16.mxu0 0
  %909 = vmatpush1.bf16.msra.mxu0 0
  %910 = vmatprep.subr.bf16.mxu0 0
  %911 = vmatpush1.bf16.msra.mxu0 0
  %912 = vmatprep.subr.bf16.mxu0 0
  %913 = vmatpush1.bf16.msra.mxu0 0
  %914 = vmatprep.mubr.bf16.mxu0 0
  %915 = vmatmul.mubr.bf16.gmra.mrb[0].mxu0 %v880
  %v916 = vpop.f32.mrb[0].mxu0
  %v917 = vadd.f32 0.0, %v916
  %v918 = vpop.f32.mrb[0].mxu0
  %v919 = vpop.f32.mrb[0].mxu0
  %v920 = vpop.f32.mrb[0].mxu0
  %921 = vdwg.mxu0
  %v930 = vunpack.c.l.b16 %v319
  %v931 = vunpack.c.l.b16 %v320
  %v932 = vunpack.c.l.b16 %v321
  %v933 = vunpack.c.l.b16 %v322
  %v934 = vunpack.c.l.b16 %v323
  %v935 = vunpack.c.l.b16 %v324
  %v936 = vunpack.c.l.b16 %v325
  %v937 = vunpack.c.l.b16 %v326
  %v938 = vsel %vm381, %v932, %v930
  %v939 = vsel %vm383, %v934, %v938
  %v940 = vsel %vm385, %v936, %v939
  %v941 = vsel %vm381, %v933, %v931
  %v942 = vsel %vm383, %v935, %v941
  %v943 = vsel %vm385, %v937, %v942
  %v944 = vpack.c.b16 %v940, %v940
  %v945 = vpack.c.b16 %v943, %v943
  %v980 = vunpack.c.l.b16 %v813
  %v981 = vunpack.c.l.b16 %v814
  %v982 = vunpack.c.l.b16 %v815
  %v983 = vunpack.c.l.b16 %v816
  %v984 = vunpack.c.l.b16 %v817
  %v985 = vunpack.c.l.b16 %v818
  %v986 = vunpack.c.l.b16 %v819
  %v987 = vunpack.c.l.b16 %v820
  %v988 = vunpack.c.l.b16 %v821
  %v989 = vunpack.c.l.b16 %v822
  %v990 = vunpack.c.l.b16 %v823
  %v991 = vunpack.c.l.b16 %v824
  %v992 = vunpack.c.l.b16 %v825
  %v993 = vunpack.c.l.b16 %v826
  %v994 = vunpack.c.l.b16 %v827
  %v995 = vunpack.c.l.b16 %v828
  %v996 = vunpack.c.l.b16 %v829
  %v997 = vunpack.c.l.b16 %v830
  %v998 = vunpack.c.l.b16 %v831
  %v999 = vunpack.c.l.b16 %v832
  %v1000 = vunpack.c.l.b16 %v833
  %v1001 = vunpack.c.l.b16 %v834
  %v1002 = vunpack.c.l.b16 %v835
  %v1003 = vunpack.c.l.b16 %v836
  %v1004 = vunpack.c.l.b16 %v837
  %v1005 = vunpack.c.l.b16 %v838
  %v1006 = vunpack.c.l.b16 %v839
  %v1007 = vunpack.c.l.b16 %v840
  %v1008 = vunpack.c.l.b16 %v841
  %v1009 = vunpack.c.l.b16 %v842
  %v1010 = vunpack.c.l.b16 %v843
  %v1011 = vunpack.c.l.b16 %v844
  %v1012 = vpack.c.b16 %v981, %v980
  %v1013 = vpack.c.b16 %v983, %v982
  %v1014 = vpack.c.b16 %v985, %v984
  %v1015 = vpack.c.b16 %v987, %v986
  %v1016 = vpack.c.b16 %v989, %v988
  %v1017 = vpack.c.b16 %v991, %v990
  %v1018 = vpack.c.b16 %v993, %v992
  %v1019 = vpack.c.b16 %v995, %v994
  %v1020 = vpack.c.b16 %v997, %v996
  %v1021 = vpack.c.b16 %v999, %v998
  %v1022 = vpack.c.b16 %v1001, %v1000
  %v1023 = vpack.c.b16 %v1003, %v1002
  %v1024 = vpack.c.b16 %v1005, %v1004
  %v1025 = vpack.c.b16 %v1007, %v1006
  %v1026 = vpack.c.b16 %v1009, %v1008
  %v1027 = vpack.c.b16 %v1011, %v1010
  %1044 = vmatprep.subr.bf16.mxu0 0
  %1045 = vmatpush1.bf16.msra.mxu0 %v1012
  %1046 = vmatprep.subr.bf16.mxu0 0
  %1047 = vmatpush1.bf16.msra.mxu0 %v1013
  %1048 = vmatprep.subr.bf16.mxu0 0
  %1049 = vmatpush1.bf16.msra.mxu0 %v1014
  %1050 = vmatprep.subr.bf16.mxu0 0
  %1051 = vmatpush1.bf16.msra.mxu0 %v1015
  %1052 = vmatprep.subr.bf16.mxu0 0
  %1053 = vmatpush1.bf16.msra.mxu0 %v1016
  %1054 = vmatprep.subr.bf16.mxu0 0
  %1055 = vmatpush1.bf16.msra.mxu0 %v1017
  %1056 = vmatprep.subr.bf16.mxu0 0
  %1057 = vmatpush1.bf16.msra.mxu0 %v1018
  %1058 = vmatprep.subr.bf16.mxu0 0
  %1059 = vmatpush1.bf16.msra.mxu0 %v1019
  %1060 = vmatprep.subr.bf16.mxu0 0
  %1061 = vmatpush1.bf16.msra.mxu0 %v1020
  %1062 = vmatprep.subr.bf16.mxu0 0
  %1063 = vmatpush1.bf16.msra.mxu0 %v1021
  %1064 = vmatprep.subr.bf16.mxu0 0
  %1065 = vmatpush1.bf16.msra.mxu0 %v1022
  %1066 = vmatprep.subr.bf16.mxu0 0
  %1067 = vmatpush1.bf16.msra.mxu0 %v1023
  %1068 = vmatprep.subr.bf16.mxu0 0
  %1069 = vmatpush1.bf16.msra.mxu0 %v1024
  %1070 = vmatprep.subr.bf16.mxu0 0
  %1071 = vmatpush1.bf16.msra.mxu0 %v1025
  %1072 = vmatprep.subr.bf16.mxu0 0
  %1073 = vmatpush1.bf16.msra.mxu0 %v1026
  %1074 = vmatprep.subr.bf16.mxu0 0
  %1075 = vmatpush1.bf16.msra.mxu0 %v1027
  %1076 = vmatprep.mubr.bf16.mxu0 %v945
  %1077 = vmatmul.mubr.bf16.gmra.mrb[0].mxu0 %v944
  %v1078 = vpop.f32.mrb[0].mxu0
  %v1079 = vadd.f32 %v917, %v1078
  %v1080 = vpop.f32.mrb[0].mxu0
  %v1081 = vpop.f32.mrb[0].mxu0
  %v1082 = vpop.f32.mrb[0].mxu0
  %1083 = vdwg.mxu0
  %v1085 = vlaneseq
  %v1086 = vshrl.u32 %v1085, 7
  %v1087 = vsub.s32 0, %v1086
  %v1088 = vrot.slane %v32, %v1087
  %v1090 = vadd.f32 %v1079, %v1088
  %v1091 = vld [vmem:[%s4] sm:$0xf]
  %v1092 = vld [vmem:[%s4 + $0x4] sm:$0xf]
  %v1093 = vld [vmem:[%s4 + $0x8] sm:$0xf]
  %v1094 = vld [vmem:[%s4 + $0xc] sm:$0xf]
  %v1095 = vld [vmem:[%s6 + $0x8] sm:$0xff]
  %1097 = vset.pattern.permute.xlu0 0
  %1098 = vperm.xlu0 %1097, %v1091
  %v1099 = vpop.permute.xlu0 %1098
  %1102 = vset.pattern.permute.xlu0 0
  %1103 = vperm.xlu0 %1102, %v1092
  %v1104 = vpop.permute.xlu0 %1103
  %1107 = vset.pattern.permute.xlu0 0
  %1108 = vperm.xlu0 %1107, %v1093
  %v1109 = vpop.permute.xlu0 %1108
  %1112 = vset.pattern.permute.xlu0 0
  %1113 = vperm.xlu0 %1112, %v1094
  %v1114 = vpop.permute.xlu0 %1113
  %v1116 = vlaneseq
  %v1117 = vshrl.u32 %v1116, 7
  %v1118 = vsub.s32 0, %v1117
  %v1119 = vrot.slane %v1095, %v1118
  %v1120 = vmul.f32 %v1099, %v1119
  %v1121 = vmul.f32 %v1104, %v1119
  %v1122 = vmul.f32 %v1109, %v1119
  %v1123 = vmul.f32 %v1114, %v1119
  %1124 = vset.pattern.permute.xlu0 1
  %1125 = vperm.xlu0 %1124, %v1091
  %v1126 = vpop.permute.xlu0 %1125
  %1128 = vset.pattern.permute.xlu0 1
  %1129 = vperm.xlu0 %1128, %v1092
  %v1130 = vpop.permute.xlu0 %1129
  %1132 = vset.pattern.permute.xlu0 1
  %1133 = vperm.xlu0 %1132, %v1093
  %v1134 = vpop.permute.xlu0 %1133
  %1136 = vset.pattern.permute.xlu0 1
  %1137 = vperm.xlu0 %1136, %v1094
  %v1138 = vpop.permute.xlu0 %1137
  %v1140 = vlaneseq
  %v1141 = vshrl.u32 %v1140, 7
  %v1142 = vsub.s32 1, %v1141
  %v1143 = vrot.slane %v1095, %v1142
  %v1144 = vmul.f32 %v1126, %v1143
  %v1145 = vmul.f32 %v1130, %v1143
  %v1146 = vmul.f32 %v1134, %v1143
  %v1147 = vmul.f32 %v1138, %v1143
  %v1148 = vadd.f32 %v1120, %v1144
  %v1149 = vadd.f32 %v1121, %v1145
  %v1150 = vadd.f32 %v1122, %v1146
  %v1151 = vadd.f32 %v1123, %v1147
  %1152 = vset.pattern.permute.xlu0 2
  %1153 = vperm.xlu0 %1152, %v1091
  %v1154 = vpop.permute.xlu0 %1153
  %1156 = vset.pattern.permute.xlu0 2
  %1157 = vperm.xlu0 %1156, %v1092
  %v1158 = vpop.permute.xlu0 %1157
  %1160 = vset.pattern.permute.xlu0 2
  %1161 = vperm.xlu0 %1160, %v1093
  %v1162 = vpop.permute.xlu0 %1161
  %1164 = vset.pattern.permute.xlu0 2
  %1165 = vperm.xlu0 %1164, %v1094
  %v1166 = vpop.permute.xlu0 %1165
  %v1168 = vlaneseq
  %v1169 = vshrl.u32 %v1168, 7
  %v1170 = vsub.s32 2, %v1169
  %v1171 = vrot.slane %v1095, %v1170
  %v1172 = vmul.f32 %v1154, %v1171
  %v1173 = vmul.f32 %v1158, %v1171
  %v1174 = vmul.f32 %v1162, %v1171
  %v1175 = vmul.f32 %v1166, %v1171
  %v1176 = vadd.f32 %v1148, %v1172
  %v1177 = vadd.f32 %v1149, %v1173
  %v1178 = vadd.f32 %v1150, %v1174
  %v1179 = vadd.f32 %v1151, %v1175
  %1180 = vset.pattern.permute.xlu0 3
  %1181 = vperm.xlu0 %1180, %v1091
  %v1182 = vpop.permute.xlu0 %1181
  %1184 = vset.pattern.permute.xlu0 3
  %1185 = vperm.xlu0 %1184, %v1092
  %v1186 = vpop.permute.xlu0 %1185
  %1188 = vset.pattern.permute.xlu0 3
  %1189 = vperm.xlu0 %1188, %v1093
  %v1190 = vpop.permute.xlu0 %1189
  %1192 = vset.pattern.permute.xlu0 3
  %1193 = vperm.xlu0 %1192, %v1094
  %v1194 = vpop.permute.xlu0 %1193
  %v1196 = vlaneseq
  %v1197 = vshrl.u32 %v1196, 7
  %v1198 = vsub.s32 3, %v1197
  %v1199 = vrot.slane %v1095, %v1198
  %v1200 = vmul.f32 %v1182, %v1199
  %v1201 = vmul.f32 %v1186, %v1199
  %v1202 = vmul.f32 %v1190, %v1199
  %v1203 = vmul.f32 %v1194, %v1199
  %v1204 = vadd.f32 %v1176, %v1200
  %v1205 = vadd.f32 %v1177, %v1201
  %v1206 = vadd.f32 %v1178, %v1202
  %v1207 = vadd.f32 %v1179, %v1203
  %1208 = vset.pattern.permute.xlu0 4
  %1209 = vperm.xlu0 %1208, %v1091
  %v1210 = vpop.permute.xlu0 %1209
  %1212 = vset.pattern.permute.xlu0 4
  %1213 = vperm.xlu0 %1212, %v1092
  %v1214 = vpop.permute.xlu0 %1213
  %1216 = vset.pattern.permute.xlu0 4
  %1217 = vperm.xlu0 %1216, %v1093
  %v1218 = vpop.permute.xlu0 %1217
  %1220 = vset.pattern.permute.xlu0 4
  %1221 = vperm.xlu0 %1220, %v1094
  %v1222 = vpop.permute.xlu0 %1221
  %v1224 = vlaneseq
  %v1225 = vshrl.u32 %v1224, 7
  %v1226 = vsub.s32 4, %v1225
  %v1227 = vrot.slane %v1095, %v1226
  %v1228 = vmul.f32 %v1210, %v1227
  %v1229 = vmul.f32 %v1214, %v1227
  %v1230 = vmul.f32 %v1218, %v1227
  %v1231 = vmul.f32 %v1222, %v1227
  %v1232 = vadd.f32 %v1204, %v1228
  %v1233 = vadd.f32 %v1205, %v1229
  %v1234 = vadd.f32 %v1206, %v1230
  %v1235 = vadd.f32 %v1207, %v1231
  %1236 = vset.pattern.permute.xlu0 5
  %1237 = vperm.xlu0 %1236, %v1091
  %v1238 = vpop.permute.xlu0 %1237
  %1240 = vset.pattern.permute.xlu0 5
  %1241 = vperm.xlu0 %1240, %v1092
  %v1242 = vpop.permute.xlu0 %1241
  %1244 = vset.pattern.permute.xlu0 5
  %1245 = vperm.xlu0 %1244, %v1093
  %v1246 = vpop.permute.xlu0 %1245
  %1248 = vset.pattern.permute.xlu0 5
  %1249 = vperm.xlu0 %1248, %v1094
  %v1250 = vpop.permute.xlu0 %1249
  %v1252 = vlaneseq
  %v1253 = vshrl.u32 %v1252, 7
  %v1254 = vsub.s32 5, %v1253
  %v1255 = vrot.slane %v1095, %v1254
  %v1256 = vmul.f32 %v1238, %v1255
  %v1257 = vmul.f32 %v1242, %v1255
  %v1258 = vmul.f32 %v1246, %v1255
  %v1259 = vmul.f32 %v1250, %v1255
  %v1260 = vadd.f32 %v1232, %v1256
  %v1261 = vadd.f32 %v1233, %v1257
  %v1262 = vadd.f32 %v1234, %v1258
  %v1263 = vadd.f32 %v1235, %v1259
  %v1265 = vlaneseq
  %v1266 = vshrl.u32 %v1265, 7
  %v1267 = vsub.s32 0, %v1266
  %v1268 = vrot.slane %v36, %v1267
  %v1270 = vadd.f32 %v1260, %v1268
  %v1271 = vadd.f32 %v1261, %v1268
  %v1272 = vadd.f32 %v1262, %v1268
  %v1273 = vadd.f32 %v1263, %v1268
  %v1274 = vmax.f32 %v1270, 0.0
  %v1275 = vmax.f32 %v1271, 0.0
  %v1276 = vmax.f32 %v1272, 0.0
  %v1277 = vmax.f32 %v1273, 0.0
  %v1279 = vlaneseq
  %v1280 = vshrl.u32 %v1279, 7
  %v1281 = vsub.s32 0, %v1280
  %v1282 = vrot.slane %v37, %v1281
  %v1284 = vmul.f32 %v1274, %v1282
  %v1285 = vmul.f32 %v1275, %v1282
  %v1286 = vmul.f32 %v1276, %v1282
  %v1287 = vmul.f32 %v1277, %v1282
  %vm1288 = vcmask 519168
  %v1289 = vsel %vm1288, %v1284, 0.0
  %1290 = vadd.xlane.f32.xlu0 %v1289
  %v1291 = vpop.xlane.xlu0 %1290
  %v1292 = vsel %vm1288, %v1285, 0.0
  %1293 = vadd.xlane.f32.xlu0 %v1292
  %v1294 = vpop.xlane.xlu0 %1293
  %v1295 = vsel %vm1288, %v1286, 0.0
  %1296 = vadd.xlane.f32.xlu0 %v1295
  %v1297 = vpop.xlane.xlu0 %1296
  %v1298 = vsel %vm1288, %v1287, 0.0
  %1299 = vadd.xlane.f32.xlu0 %v1298
  %v1300 = vpop.xlane.xlu0 %1299
  %v1301 = vlaneseq
  %v1302 = vshrl.u32 %v1301, 7
  %v1303 = vlaneseq
  %v1304 = vand.u32 %v1303, 127
  %vm1305 = vcmp.eq.s32.totalorder %v1302, %v1304
  %v1310 = vlaneseq
  %v1311 = vshrl.u32 %v1310, 7
  %v1312 = vsub.s32 %v1304, %v1311
  %v1313 = vrot.slane %v1291, %v1312
  %v1314 = vlaneseq
  %v1315 = vshrl.u32 %v1314, 7
  %v1316 = vsub.s32 %v1304, %v1315
  %v1317 = vrot.slane %v1294, %v1316
  %v1318 = vlaneseq
  %v1319 = vshrl.u32 %v1318, 7
  %v1320 = vsub.s32 %v1304, %v1319
  %v1321 = vrot.slane %v1297, %v1320
  %v1322 = vlaneseq
  %v1323 = vshrl.u32 %v1322, 7
  %v1324 = vsub.s32 %v1304, %v1323
  %v1325 = vrot.slane %v1300, %v1324
  %v1326 = vsel %vm381, %v1317, %v1313
  %v1327 = vsel %vm383, %v1321, %v1326
  %v1328 = vsel %vm385, %v1325, %v1327
  %v1330 = vsel %vm1305, -inf, %v1328
  %vm1331 = vcmask 27648
  %v1332 = vsel %vm1331, %v1330, -inf
  %1333 = vmax.xlane.f32.xlu0 %v1332
  %v1334 = vpop.xlane.xlu0 %1333
  %v1335 = vsub.f32 %v1330, %v1334
  %v1336 = vmul.f32 %v1335, 1.442695
  %v1337 = vpow.pop %v1336
  %v1338 = vsel %vm1331, %v1337, 0.0
  %1339 = vadd.xlane.f32.xlu0 %v1338
  %v1340 = vpop.xlane.xlu0 %1339
  %v1341 = vrcp.pop %v1340
  %v1342 = vmul.f32 %v1337, %v1341
  %v1343 = vpack.c.bf16 %v525, %v525
  %v1344 = vld [vmem:[%s5 + $0x1a0] sm:$0xf]
  %v1345 = vld [vmem:[%s5 + $0x1a4] sm:$0xf]
  %v1346 = vld [vmem:[%s5 + $0x1a8] sm:$0xf]
  %v1347 = vld [vmem:[%s5 + $0x1ac] sm:$0xf]
  %v1348 = vld [vmem:[%s5 + $0x1b0] sm:$0xf]
  %v1349 = vld [vmem:[%s5 + $0x1b4] sm:$0xf]
  %v1350 = vld [vmem:[%s5 + $0x1b8] sm:$0xf]
  %v1351 = vld [vmem:[%s5 + $0x1bc] sm:$0xf]
  %v1352 = vld [vmem:[%s5 + $0x1c0] sm:$0xf]
  %v1353 = vld [vmem:[%s5 + $0x1c4] sm:$0xf]
  %v1354 = vld [vmem:[%s5 + $0x1c8] sm:$0xf]
  %v1355 = vld [vmem:[%s5 + $0x1cc] sm:$0xf]
  %v1356 = vld [vmem:[%s5 + $0x1d0] sm:$0xf]
  %v1357 = vld [vmem:[%s5 + $0x1d4] sm:$0xf]
  %v1358 = vld [vmem:[%s5 + $0x1d8] sm:$0xf]
  %v1359 = vld [vmem:[%s5 + $0x1dc] sm:$0xf]
  %v1376 = vunpack.c.l.b16 %v1344
  %v1377 = vunpack.c.l.b16 %v1345
  %v1378 = vunpack.c.l.b16 %v1346
  %v1379 = vunpack.c.l.b16 %v1347
  %v1380 = vunpack.c.l.b16 %v1348
  %v1381 = vunpack.c.l.b16 %v1349
  %v1382 = vunpack.c.l.b16 %v1350
  %v1383 = vunpack.c.l.b16 %v1351
  %v1384 = vunpack.c.l.b16 %v1352
  %v1385 = vunpack.c.l.b16 %v1353
  %v1386 = vunpack.c.l.b16 %v1354
  %v1387 = vunpack.c.l.b16 %v1355
  %v1388 = vunpack.c.l.b16 %v1356
  %v1389 = vunpack.c.l.b16 %v1357
  %v1390 = vunpack.c.l.b16 %v1358
  %v1391 = vunpack.c.l.b16 %v1359
  %v1392 = vpack.c.b16 %v1377, %v1376
  %v1393 = vpack.c.b16 %v1379, %v1378
  %v1394 = vpack.c.b16 %v1381, %v1380
  %v1395 = vpack.c.b16 %v1383, %v1382
  %v1396 = vpack.c.b16 %v1385, %v1384
  %v1397 = vpack.c.b16 %v1387, %v1386
  %v1398 = vpack.c.b16 %v1389, %v1388
  %v1399 = vpack.c.b16 %v1391, %v1390
  %1408 = vmatprep.subr.bf16.mxu0 0
  %1409 = vmatpush1.bf16.msra.mxu0 %v1392
  %1410 = vmatprep.subr.bf16.mxu0 0
  %1411 = vmatpush1.bf16.msra.mxu0 %v1393
  %1412 = vmatprep.subr.bf16.mxu0 0
  %1413 = vmatpush1.bf16.msra.mxu0 %v1394
  %1414 = vmatprep.subr.bf16.mxu0 0
  %1415 = vmatpush1.bf16.msra.mxu0 %v1395
  %1416 = vmatprep.subr.bf16.mxu0 0
  %1417 = vmatpush1.bf16.msra.mxu0 %v1396
  %1418 = vmatprep.subr.bf16.mxu0 0
  %1419 = vmatpush1.bf16.msra.mxu0 %v1397
  %1420 = vmatprep.subr.bf16.mxu0 0
  %1421 = vmatpush1.bf16.msra.mxu0 %v1398
  %1422 = vmatprep.subr.bf16.mxu0 0
  %1423 = vmatpush1.bf16.msra.mxu0 %v1399
  %1424 = vmatprep.subr.bf16.mxu0 0
  %1425 = vmatpush1.bf16.msra.mxu0 0
  %1426 = vmatprep.subr.bf16.mxu0 0
  %1427 = vmatpush1.bf16.msra.mxu0 0
  %1428 = vmatprep.subr.bf16.mxu0 0
  %1429 = vmatpush1.bf16.msra.mxu0 0
  %1430 = vmatprep.subr.bf16.mxu0 0
  %1431 = vmatpush1.bf16.msra.mxu0 0
  %1432 = vmatprep.subr.bf16.mxu0 0
  %1433 = vmatpush1.bf16.msra.mxu0 0
  %1434 = vmatprep.subr.bf16.mxu0 0
  %1435 = vmatpush1.bf16.msra.mxu0 0
  %1436 = vmatprep.subr.bf16.mxu0 0
  %1437 = vmatpush1.bf16.msra.mxu0 0
  %1438 = vmatprep.subr.bf16.mxu0 0
  %1439 = vmatpush1.bf16.msra.mxu0 0
  %1440 = vmatprep.mubr.bf16.mxu0 0
  %1441 = vmatmul.mubr.bf16.gmra.mrb[0].mxu0 %v1343
  %v1442 = vpop.f32.mrb[0].mxu0
  %v1443 = vadd.f32 0.0, %v1442
  %v1444 = vpop.f32.mrb[0].mxu0
  %v1445 = vpop.f32.mrb[0].mxu0
  %v1446 = vpop.f32.mrb[0].mxu0
  %1447 = vdwg.mxu0
  %v1448 = vpack.c.bf16 %v1342, %v1342
  %v1449 = vpack.c.bf16 %v1443, %v1443
  %vm1450 = vcmask 31744
  %v1452 = vsel %vm1450, %v1448, 0
  %vm1454 = vcmask 1041408
  %v1456 = vsel %vm1454, %v1449, 0
  %1458 = vmatprep.subr.bf16.mxu0 0
  %1459 = vmatpush1.bf16.msra.mxu0 %v1456
  %1460 = vmatprep.subr.bf16.mxu0 0
  %1461 = vmatpush1.bf16.msra.mxu0 0
  %1462 = vmatprep.subr.bf16.mxu0 0
  %1463 = vmatpush1.bf16.msra.mxu0 0
  %1464 = vmatprep.subr.bf16.mxu0 0
  %1465 = vmatpush1.bf16.msra.mxu0 0
  %1466 = vmatprep.subr.bf16.mxu0 0
  %1467 = vmatpush1.bf16.msra.mxu0 0
  %1468 = vmatprep.subr.bf16.mxu0 0
  %1469 = vmatpush1.bf16.msra.mxu0 0
  %1470 = vmatprep.subr.bf16.mxu0 0
  %1471 = vmatpush1.bf16.msra.mxu0 0
  %1472 = vmatprep.subr.bf16.mxu0 0
  %1473 = vmatpush1.bf16.msra.mxu0 0
  %1474 = vmatprep.subr.bf16.mxu0 0
  %1475 = vmatpush1.bf16.msra.mxu0 0
  %1476 = vmatprep.subr.bf16.mxu0 0
  %1477 = vmatpush1.bf16.msra.mxu0 0
  %1478 = vmatprep.subr.bf16.mxu0 0
  %1479 = vmatpush1.bf16.msra.mxu0 0
  %1480 = vmatprep.subr.bf16.mxu0 0
  %1481 = vmatpush1.bf16.msra.mxu0 0
  %1482 = vmatprep.subr.bf16.mxu0 0
  %1483 = vmatpush1.bf16.msra.mxu0 0
  %1484 = vmatprep.subr.bf16.mxu0 0
  %1485 = vmatpush1.bf16.msra.mxu0 0
  %1486 = vmatprep.subr.bf16.mxu0 0
  %1487 = vmatpush1.bf16.msra.mxu0 0
  %1488 = vmatprep.subr.bf16.mxu0 0
  %1489 = vmatpush1.bf16.msra.mxu0 0
  %1490 = vmatprep.mubr.bf16.mxu0 0
  %1491 = vmatmul.mubr.bf16.gmra.mrb[0].mxu0 %v1452
  %v1492 = vpop.f32.mrb[0].mxu0
  %v1493 = vadd.f32 0.0, %v1492
  %v1494 = vpop.f32.mrb[0].mxu0
  %v1495 = vpop.f32.mrb[0].mxu0
  %v1496 = vpop.f32.mrb[0].mxu0
  %1497 = vdwg.mxu0
  %v1498 = vpack.c.bf16 %v1493, %v1493
  %v1499 = vld [vmem:[%s5 + $0x1e0] sm:$0xf]
  %v1500 = vld [vmem:[%s5 + $0x1e4] sm:$0xf]
  %v1501 = vld [vmem:[%s5 + $0x1e8] sm:$0xf]
  %v1502 = vld [vmem:[%s5 + $0x1ec] sm:$0xf]
  %v1503 = vld [vmem:[%s5 + $0x1f0] sm:$0xf]
  %v1504 = vld [vmem:[%s5 + $0x1f4] sm:$0xf]
  %v1505 = vld [vmem:[%s5 + $0x1f8] sm:$0xf]
  %v1506 = vld [vmem:[%s5 + $0x1fc] sm:$0xf]
  %v1507 = vld [vmem:[%s5 + $0x200] sm:$0xf]
  %v1508 = vld [vmem:[%s5 + $0x204] sm:$0xf]
  %v1509 = vld [vmem:[%s5 + $0x208] sm:$0xf]
  %v1510 = vld [vmem:[%s5 + $0x20c] sm:$0xf]
  %v1511 = vld [vmem:[%s5 + $0x210] sm:$0xf]
  %v1512 = vld [vmem:[%s5 + $0x214] sm:$0xf]
  %v1513 = vld [vmem:[%s5 + $0x218] sm:$0xf]
  %v1514 = vld [vmem:[%s5 + $0x21c] sm:$0xf]
  %v1515 = vpack.c.bf16 %v1090, %v1090
  %v1516 = vld [vmem:[%s5 + $0x220] sm:$0xf]
  %v1517 = vld [vmem:[%s5 + $0x224] sm:$0xf]
  %v1518 = vld [vmem:[%s5 + $0x228] sm:$0xf]
  %v1519 = vld [vmem:[%s5 + $0x22c] sm:$0xf]
  %v1520 = vld [vmem:[%s5 + $0x230] sm:$0xf]
  %v1521 = vld [vmem:[%s5 + $0x234] sm:$0xf]
  %v1522 = vld [vmem:[%s5 + $0x238] sm:$0xf]
  %v1523 = vld [vmem:[%s5 + $0x23c] sm:$0xf]
  %v1524 = vld [vmem:[%s5 + $0x240] sm:$0xf]
  %v1525 = vld [vmem:[%s5 + $0x244] sm:$0xf]
  %v1526 = vld [vmem:[%s5 + $0x248] sm:$0xf]
  %v1527 = vld [vmem:[%s5 + $0x24c] sm:$0xf]
  %v1528 = vld [vmem:[%s5 + $0x250] sm:$0xf]
  %v1529 = vld [vmem:[%s5 + $0x254] sm:$0xf]
  %v1530 = vld [vmem:[%s5 + $0x258] sm:$0xf]
  %v1531 = vld [vmem:[%s5 + $0x25c] sm:$0xf]
  %v1548 = vunpack.c.l.b16 %v1516
  %v1549 = vunpack.c.l.b16 %v1517
  %v1550 = vunpack.c.l.b16 %v1518
  %v1551 = vunpack.c.l.b16 %v1519
  %v1552 = vunpack.c.l.b16 %v1520
  %v1553 = vunpack.c.l.b16 %v1521
  %v1554 = vunpack.c.l.b16 %v1522
  %v1555 = vunpack.c.l.b16 %v1523
  %v1556 = vunpack.c.l.b16 %v1524
  %v1557 = vunpack.c.l.b16 %v1525
  %v1558 = vunpack.c.l.b16 %v1526
  %v1559 = vunpack.c.l.b16 %v1527
  %v1560 = vunpack.c.l.b16 %v1528
  %v1561 = vunpack.c.l.b16 %v1529
  %v1562 = vunpack.c.l.b16 %v1530
  %v1563 = vunpack.c.l.b16 %v1531
  %v1564 = vpack.c.b16 %v1549, %v1548
  %v1565 = vpack.c.b16 %v1551, %v1550
  %v1566 = vpack.c.b16 %v1553, %v1552
  %v1567 = vpack.c.b16 %v1555, %v1554
  %v1568 = vpack.c.b16 %v1557, %v1556
  %v1569 = vpack.c.b16 %v1559, %v1558
  %v1570 = vpack.c.b16 %v1561, %v1560
  %v1571 = vpack.c.b16 %v1563, %v1562
  %1580 = vmatprep.subr.bf16.mxu0 0
  %1581 = vmatpush1.bf16.msra.mxu0 %v1564
  %1582 = vmatprep.subr.bf16.mxu0 0
  %1583 = vmatpush1.bf16.msra.mxu0 %v1565
  %1584 = vmatprep.subr.bf16.mxu0 0
  %1585 = vmatpush1.bf16.msra.mxu0 %v1566
  %1586 = vmatprep.subr.bf16.mxu0 0
  %1587 = vmatpush1.bf16.msra.mxu0 %v1567
  %1588 = vmatprep.subr.bf16.mxu0 0
  %1589 = vmatpush1.bf16.msra.mxu0 %v1568
  %1590 = vmatprep.subr.bf16.mxu0 0
  %1591 = vmatpush1.bf16.msra.mxu0 %v1569
  %1592 = vmatprep.subr.bf16.mxu0 0
  %1593 = vmatpush1.bf16.msra.mxu0 %v1570
  %1594 = vmatprep.subr.bf16.mxu0 0
  %1595 = vmatpush1.bf16.msra.mxu0 %v1571
  %1596 = vmatprep.subr.bf16.mxu0 0
  %1597 = vmatpush1.bf16.msra.mxu0 0
  %1598 = vmatprep.subr.bf16.mxu0 0
  %1599 = vmatpush1.bf16.msra.mxu0 0
  %1600 = vmatprep.subr.bf16.mxu0 0
  %1601 = vmatpush1.bf16.msra.mxu0 0
  %1602 = vmatprep.subr.bf16.mxu0 0
  %1603 = vmatpush1.bf16.msra.mxu0 0
  %1604 = vmatprep.subr.bf16.mxu0 0
  %1605 = vmatpush1.bf16.msra.mxu0 0
  %1606 = vmatprep.subr.bf16.mxu0 0
  %1607 = vmatpush1.bf16.msra.mxu0 0
  %1608 = vmatprep.subr.bf16.mxu0 0
  %1609 = vmatpush1.bf16.msra.mxu0 0
  %1610 = vmatprep.subr.bf16.mxu0 0
  %1611 = vmatpush1.bf16.msra.mxu0 0
  %1612 = vmatprep.mubr.bf16.mxu0 0
  %1613 = vmatmul.mubr.bf16.gmra.mrb[0].mxu0 %v1515
  %v1614 = vpop.f32.mrb[0].mxu0
  %v1615 = vadd.f32 0.0, %v1614
  %v1616 = vpop.f32.mrb[0].mxu0
  %v1617 = vpop.f32.mrb[0].mxu0
  %v1618 = vpop.f32.mrb[0].mxu0
  %1619 = vdwg.mxu0
  %v1636 = vunpack.c.l.b16 %v1499
  %v1637 = vunpack.c.l.b16 %v1500
  %v1638 = vunpack.c.l.b16 %v1501
  %v1639 = vunpack.c.l.b16 %v1502
  %v1640 = vunpack.c.l.b16 %v1503
  %v1641 = vunpack.c.l.b16 %v1504
  %v1642 = vunpack.c.l.b16 %v1505
  %v1643 = vunpack.c.l.b16 %v1506
  %v1644 = vunpack.c.l.b16 %v1507
  %v1645 = vunpack.c.l.b16 %v1508
  %v1646 = vunpack.c.l.b16 %v1509
  %v1647 = vunpack.c.l.b16 %v1510
  %v1648 = vunpack.c.l.b16 %v1511
  %v1649 = vunpack.c.l.b16 %v1512
  %v1650 = vunpack.c.l.b16 %v1513
  %v1651 = vunpack.c.l.b16 %v1514
  %v1652 = vpack.c.b16 %v1637, %v1636
  %v1653 = vpack.c.b16 %v1639, %v1638
  %v1654 = vpack.c.b16 %v1641, %v1640
  %v1655 = vpack.c.b16 %v1643, %v1642
  %v1656 = vpack.c.b16 %v1645, %v1644
  %v1657 = vpack.c.b16 %v1647, %v1646
  %v1658 = vpack.c.b16 %v1649, %v1648
  %v1659 = vpack.c.b16 %v1651, %v1650
  %1668 = vmatprep.subr.bf16.mxu0 0
  %1669 = vmatpush1.bf16.msra.mxu0 %v1652
  %1670 = vmatprep.subr.bf16.mxu0 0
  %1671 = vmatpush1.bf16.msra.mxu0 %v1653
  %1672 = vmatprep.subr.bf16.mxu0 0
  %1673 = vmatpush1.bf16.msra.mxu0 %v1654
  %1674 = vmatprep.subr.bf16.mxu0 0
  %1675 = vmatpush1.bf16.msra.mxu0 %v1655
  %1676 = vmatprep.subr.bf16.mxu0 0
  %1677 = vmatpush1.bf16.msra.mxu0 %v1656
  %1678 = vmatprep.subr.bf16.mxu0 0
  %1679 = vmatpush1.bf16.msra.mxu0 %v1657
  %1680 = vmatprep.subr.bf16.mxu0 0
  %1681 = vmatpush1.bf16.msra.mxu0 %v1658
  %1682 = vmatprep.subr.bf16.mxu0 0
  %1683 = vmatpush1.bf16.msra.mxu0 %v1659
  %1684 = vmatprep.subr.bf16.mxu0 0
  %1685 = vmatpush1.bf16.msra.mxu0 0
  %1686 = vmatprep.subr.bf16.mxu0 0
  %1687 = vmatpush1.bf16.msra.mxu0 0
  %1688 = vmatprep.subr.bf16.mxu0 0
  %1689 = vmatpush1.bf16.msra.mxu0 0
  %1690 = vmatprep.subr.bf16.mxu0 0
  %1691 = vmatpush1.bf16.msra.mxu0 0
  %1692 = vmatprep.subr.bf16.mxu0 0
  %1693 = vmatpush1.bf16.msra.mxu0 0
  %1694 = vmatprep.subr.bf16.mxu0 0
  %1695 = vmatpush1.bf16.msra.mxu0 0
  %1696 = vmatprep.subr.bf16.mxu0 0
  %1697 = vmatpush1.bf16.msra.mxu0 0
  %1698 = vmatprep.subr.bf16.mxu0 0
  %1699 = vmatpush1.bf16.msra.mxu0 0
  %1700 = vmatprep.mubr.bf16.mxu0 0
  %1701 = vmatmul.mubr.bf16.gmra.mrb[0].mxu0 %v1498
  %v1702 = vpop.f32.mrb[0].mxu0
  %v1703 = vadd.f32 %v1615, %v1702
  %v1704 = vpop.f32.mrb[0].mxu0
  %v1705 = vpop.f32.mrb[0].mxu0
  %v1706 = vpop.f32.mrb[0].mxu0
  %1707 = vdwg.mxu0
  %v1708 = vld [vmem:[%s5 + $0x260] sm:$0xf]
  %v1709 = vld [vmem:[%s5 + $0x264] sm:$0xf]
  %v1710 = vld [vmem:[%s5 + $0x268] sm:$0xf]
  %v1711 = vld [vmem:[%s5 + $0x26c] sm:$0xf]
  %v1712 = vld [vmem:[%s5 + $0x270] sm:$0xf]
  %v1713 = vld [vmem:[%s5 + $0x274] sm:$0xf]
  %v1714 = vld [vmem:[%s5 + $0x278] sm:$0xf]
  %v1715 = vld [vmem:[%s5 + $0x27c] sm:$0xf]
  %v1716 = vld [vmem:[%s5 + $0x280] sm:$0xf]
  %v1717 = vld [vmem:[%s5 + $0x284] sm:$0xf]
  %v1718 = vld [vmem:[%s5 + $0x288] sm:$0xf]
  %v1719 = vld [vmem:[%s5 + $0x28c] sm:$0xf]
  %v1720 = vld [vmem:[%s5 + $0x290] sm:$0xf]
  %v1721 = vld [vmem:[%s5 + $0x294] sm:$0xf]
  %v1722 = vld [vmem:[%s5 + $0x298] sm:$0xf]
  %v1723 = vld [vmem:[%s5 + $0x29c] sm:$0xf]
  %v1740 = vunpack.c.l.b16 %v1708
  %v1741 = vunpack.c.l.b16 %v1709
  %v1742 = vunpack.c.l.b16 %v1710
  %v1743 = vunpack.c.l.b16 %v1711
  %v1744 = vunpack.c.l.b16 %v1712
  %v1745 = vunpack.c.l.b16 %v1713
  %v1746 = vunpack.c.l.b16 %v1714
  %v1747 = vunpack.c.l.b16 %v1715
  %v1748 = vunpack.c.l.b16 %v1716
  %v1749 = vunpack.c.l.b16 %v1717
  %v1750 = vunpack.c.l.b16 %v1718
  %v1751 = vunpack.c.l.b16 %v1719
  %v1752 = vunpack.c.l.b16 %v1720
  %v1753 = vunpack.c.l.b16 %v1721
  %v1754 = vunpack.c.l.b16 %v1722
  %v1755 = vunpack.c.l.b16 %v1723
  %v1756 = vpack.c.b16 %v1741, %v1740
  %v1757 = vpack.c.b16 %v1743, %v1742
  %v1758 = vpack.c.b16 %v1745, %v1744
  %v1759 = vpack.c.b16 %v1747, %v1746
  %v1760 = vpack.c.b16 %v1749, %v1748
  %v1761 = vpack.c.b16 %v1751, %v1750
  %v1762 = vpack.c.b16 %v1753, %v1752
  %v1763 = vpack.c.b16 %v1755, %v1754
  %1772 = vmatprep.subr.bf16.mxu0 0
  %1773 = vmatpush1.bf16.msra.mxu0 %v1756
  %1774 = vmatprep.subr.bf16.mxu0 0
  %1775 = vmatpush1.bf16.msra.mxu0 %v1757
  %1776 = vmatprep.subr.bf16.mxu0 0
  %1777 = vmatpush1.bf16.msra.mxu0 %v1758
  %1778 = vmatprep.subr.bf16.mxu0 0
  %1779 = vmatpush1.bf16.msra.mxu0 %v1759
  %1780 = vmatprep.subr.bf16.mxu0 0
  %1781 = vmatpush1.bf16.msra.mxu0 %v1760
  %1782 = vmatprep.subr.bf16.mxu0 0
  %1783 = vmatpush1.bf16.msra.mxu0 %v1761
  %1784 = vmatprep.subr.bf16.mxu0 0
  %1785 = vmatpush1.bf16.msra.mxu0 %v1762
  %1786 = vmatprep.subr.bf16.mxu0 0
  %1787 = vmatpush1.bf16.msra.mxu0 %v1763
  %1788 = vmatprep.subr.bf16.mxu0 0
  %1789 = vmatpush1.bf16.msra.mxu0 0
  %1790 = vmatprep.subr.bf16.mxu0 0
  %1791 = vmatpush1.bf16.msra.mxu0 0
  %1792 = vmatprep.subr.bf16.mxu0 0
  %1793 = vmatpush1.bf16.msra.mxu0 0
  %1794 = vmatprep.subr.bf16.mxu0 0
  %1795 = vmatpush1.bf16.msra.mxu0 0
  %1796 = vmatprep.subr.bf16.mxu0 0
  %1797 = vmatpush1.bf16.msra.mxu0 0
  %1798 = vmatprep.subr.bf16.mxu0 0
  %1799 = vmatpush1.bf16.msra.mxu0 0
  %1800 = vmatprep.subr.bf16.mxu0 0
  %1801 = vmatpush1.bf16.msra.mxu0 0
  %1802 = vmatprep.subr.bf16.mxu0 0
  %1803 = vmatpush1.bf16.msra.mxu0 0
  %1804 = vmatprep.mubr.bf16.mxu0 0
  %1805 = vmatmul.mubr.bf16.gmra.mrb[0].mxu0 %v1343
  %v1806 = vpop.f32.mrb[0].mxu0
  %v1807 = vadd.f32 0.0, %v1806
  %v1808 = vpop.f32.mrb[0].mxu0
  %v1809 = vpop.f32.mrb[0].mxu0
  %v1810 = vpop.f32.mrb[0].mxu0
  %1811 = vdwg.mxu0
  %v1812 = vadd.f32 %v1703, %v1807
  %v1813 = vpack.c.bf16 %v725, %v725
  %v1814 = vld [vmem:[%s5 + $0x2a0] sm:$0xf]
  %v1815 = vld [vmem:[%s5 + $0x2a4] sm:$0xf]
  %v1816 = vld [vmem:[%s5 + $0x2a8] sm:$0xf]
  %v1817 = vld [vmem:[%s5 + $0x2ac] sm:$0xf]
  %v1818 = vld [vmem:[%s5 + $0x2b0] sm:$0xf]
  %v1819 = vld [vmem:[%s5 + $0x2b4] sm:$0xf]
  %v1820 = vld [vmem:[%s5 + $0x2b8] sm:$0xf]
  %v1821 = vld [vmem:[%s5 + $0x2bc] sm:$0xf]
  %v1822 = vld [vmem:[%s5 + $0x2c0] sm:$0xf]
  %v1823 = vld [vmem:[%s5 + $0x2c4] sm:$0xf]
  %v1824 = vld [vmem:[%s5 + $0x2c8] sm:$0xf]
  %v1825 = vld [vmem:[%s5 + $0x2cc] sm:$0xf]
  %v1826 = vld [vmem:[%s5 + $0x2d0] sm:$0xf]
  %v1827 = vld [vmem:[%s5 + $0x2d4] sm:$0xf]
  %v1828 = vld [vmem:[%s5 + $0x2d8] sm:$0xf]
  %v1829 = vld [vmem:[%s5 + $0x2dc] sm:$0xf]
  %v1846 = vunpack.c.l.b16 %v1814
  %v1847 = vunpack.c.l.b16 %v1815
  %v1848 = vunpack.c.l.b16 %v1816
  %v1849 = vunpack.c.l.b16 %v1817
  %v1850 = vunpack.c.l.b16 %v1818
  %v1851 = vunpack.c.l.b16 %v1819
  %v1852 = vunpack.c.l.b16 %v1820
  %v1853 = vunpack.c.l.b16 %v1821
  %v1854 = vunpack.c.l.b16 %v1822
  %v1855 = vunpack.c.l.b16 %v1823
  %v1856 = vunpack.c.l.b16 %v1824
  %v1857 = vunpack.c.l.b16 %v1825
  %v1858 = vunpack.c.l.b16 %v1826
  %v1859 = vunpack.c.l.b16 %v1827
  %v1860 = vunpack.c.l.b16 %v1828
  %v1861 = vunpack.c.l.b16 %v1829
  %v1862 = vpack.c.b16 %v1847, %v1846
  %v1863 = vpack.c.b16 %v1849, %v1848
  %v1864 = vpack.c.b16 %v1851, %v1850
  %v1865 = vpack.c.b16 %v1853, %v1852
  %v1866 = vpack.c.b16 %v1855, %v1854
  %v1867 = vpack.c.b16 %v1857, %v1856
  %v1868 = vpack.c.b16 %v1859, %v1858
  %v1869 = vpack.c.b16 %v1861, %v1860
  %1878 = vmatprep.subr.bf16.mxu0 0
  %1879 = vmatpush1.bf16.msra.mxu0 %v1862
  %1880 = vmatprep.subr.bf16.mxu0 0
  %1881 = vmatpush1.bf16.msra.mxu0 %v1863
  %1882 = vmatprep.subr.bf16.mxu0 0
  %1883 = vmatpush1.bf16.msra.mxu0 %v1864
  %1884 = vmatprep.subr.bf16.mxu0 0
  %1885 = vmatpush1.bf16.msra.mxu0 %v1865
  %1886 = vmatprep.subr.bf16.mxu0 0
  %1887 = vmatpush1.bf16.msra.mxu0 %v1866
  %1888 = vmatprep.subr.bf16.mxu0 0
  %1889 = vmatpush1.bf16.msra.mxu0 %v1867
  %1890 = vmatprep.subr.bf16.mxu0 0
  %1891 = vmatpush1.bf16.msra.mxu0 %v1868
  %1892 = vmatprep.subr.bf16.mxu0 0
  %1893 = vmatpush1.bf16.msra.mxu0 %v1869
  %1894 = vmatprep.subr.bf16.mxu0 0
  %1895 = vmatpush1.bf16.msra.mxu0 0
  %1896 = vmatprep.subr.bf16.mxu0 0
  %1897 = vmatpush1.bf16.msra.mxu0 0
  %1898 = vmatprep.subr.bf16.mxu0 0
  %1899 = vmatpush1.bf16.msra.mxu0 0
  %1900 = vmatprep.subr.bf16.mxu0 0
  %1901 = vmatpush1.bf16.msra.mxu0 0
  %1902 = vmatprep.subr.bf16.mxu0 0
  %1903 = vmatpush1.bf16.msra.mxu0 0
  %1904 = vmatprep.subr.bf16.mxu0 0
  %1905 = vmatpush1.bf16.msra.mxu0 0
  %1906 = vmatprep.subr.bf16.mxu0 0
  %1907 = vmatpush1.bf16.msra.mxu0 0
  %1908 = vmatprep.subr.bf16.mxu0 0
  %1909 = vmatpush1.bf16.msra.mxu0 0
  %1910 = vmatprep.mubr.bf16.mxu0 0
  %1911 = vmatmul.mubr.bf16.gmra.mrb[0].mxu0 %v1813
  %v1912 = vpop.f32.mrb[0].mxu0
  %v1913 = vadd.f32 0.0, %v1912
  %v1914 = vpop.f32.mrb[0].mxu0
  %v1915 = vpop.f32.mrb[0].mxu0
  %v1916 = vpop.f32.mrb[0].mxu0
  %1917 = vdwg.mxu0
  %v1918 = vadd.f32 %v1812, %v1913
  %v1920 = vlaneseq
  %v1921 = vshrl.u32 %v1920, 7
  %v1922 = vsub.s32 0, %v1921
  %v1923 = vrot.slane %v33, %v1922
  %v1925 = vadd.f32 %v1918, %v1923
  %v1926 = vmax.f32 %v1925, 0.0
  %v1927 = vpack.c.bf16 %v1926, %v1926
  %v1928 = vld [vmem:[%s5 + $0x2e0] sm:$0xf]
  %v1929 = vld [vmem:[%s5 + $0x2e4] sm:$0xf]
  %v1930 = vld [vmem:[%s5 + $0x2e8] sm:$0xf]
  %v1931 = vld [vmem:[%s5 + $0x2ec] sm:$0xf]
  %v1932 = vld [vmem:[%s5 + $0x2f0] sm:$0xf]
  %v1933 = vld [vmem:[%s5 + $0x2f4] sm:$0xf]
  %v1934 = vld [vmem:[%s5 + $0x2f8] sm:$0xf]
  %v1935 = vld [vmem:[%s5 + $0x2fc] sm:$0xf]
  %v1936 = vld [vmem:[%s5 + $0x300] sm:$0xf]
  %v1937 = vld [vmem:[%s5 + $0x304] sm:$0xf]
  %v1938 = vld [vmem:[%s5 + $0x308] sm:$0xf]
  %v1939 = vld [vmem:[%s5 + $0x30c] sm:$0xf]
  %v1940 = vld [vmem:[%s5 + $0x310] sm:$0xf]
  %v1941 = vld [vmem:[%s5 + $0x314] sm:$0xf]
  %v1942 = vld [vmem:[%s5 + $0x318] sm:$0xf]
  %v1943 = vld [vmem:[%s5 + $0x31c] sm:$0xf]
  %v1945 = vlaneseq
  %v1946 = vshrl.u32 %v1945, 7
  %v1947 = vsub.s32 0, %v1946
  %v1948 = vrot.slane %v34, %v1947
  %v1966 = vunpack.c.l.b16 %v1928
  %v1967 = vunpack.c.l.b16 %v1929
  %v1968 = vunpack.c.l.b16 %v1930
  %v1969 = vunpack.c.l.b16 %v1931
  %v1970 = vunpack.c.l.b16 %v1932
  %v1971 = vunpack.c.l.b16 %v1933
  %v1972 = vunpack.c.l.b16 %v1934
  %v1973 = vunpack.c.l.b16 %v1935
  %v1974 = vunpack.c.l.b16 %v1936
  %v1975 = vunpack.c.l.b16 %v1937
  %v1976 = vunpack.c.l.b16 %v1938
  %v1977 = vunpack.c.l.b16 %v1939
  %v1978 = vunpack.c.l.b16 %v1940
  %v1979 = vunpack.c.l.b16 %v1941
  %v1980 = vunpack.c.l.b16 %v1942
  %v1981 = vunpack.c.l.b16 %v1943
  %v1982 = vpack.c.b16 %v1967, %v1966
  %v1983 = vpack.c.b16 %v1969, %v1968
  %v1984 = vpack.c.b16 %v1971, %v1970
  %v1985 = vpack.c.b16 %v1973, %v1972
  %v1986 = vpack.c.b16 %v1975, %v1974
  %v1987 = vpack.c.b16 %v1977, %v1976
  %v1988 = vpack.c.b16 %v1979, %v1978
  %v1989 = vpack.c.b16 %v1981, %v1980
  %1998 = vmatprep.subr.bf16.mxu0 0
  %1999 = vmatpush1.bf16.msra.mxu0 %v1982
  %2000 = vmatprep.subr.bf16.mxu0 0
  %2001 = vmatpush1.bf16.msra.mxu0 %v1983
  %2002 = vmatprep.subr.bf16.mxu0 0
  %2003 = vmatpush1.bf16.msra.mxu0 %v1984
  %2004 = vmatprep.subr.bf16.mxu0 0
  %2005 = vmatpush1.bf16.msra.mxu0 %v1985
  %2006 = vmatprep.subr.bf16.mxu0 0
  %2007 = vmatpush1.bf16.msra.mxu0 %v1986
  %2008 = vmatprep.subr.bf16.mxu0 0
  %2009 = vmatpush1.bf16.msra.mxu0 %v1987
  %2010 = vmatprep.subr.bf16.mxu0 0
  %2011 = vmatpush1.bf16.msra.mxu0 %v1988
  %2012 = vmatprep.subr.bf16.mxu0 0
  %2013 = vmatpush1.bf16.msra.mxu0 %v1989
  %2014 = vmatprep.subr.bf16.mxu0 0
  %2015 = vmatpush1.bf16.msra.mxu0 0
  %2016 = vmatprep.subr.bf16.mxu0 0
  %2017 = vmatpush1.bf16.msra.mxu0 0
  %2018 = vmatprep.subr.bf16.mxu0 0
  %2019 = vmatpush1.bf16.msra.mxu0 0
  %2020 = vmatprep.subr.bf16.mxu0 0
  %2021 = vmatpush1.bf16.msra.mxu0 0
  %2022 = vmatprep.subr.bf16.mxu0 0
  %2023 = vmatpush1.bf16.msra.mxu0 0
  %2024 = vmatprep.subr.bf16.mxu0 0
  %2025 = vmatpush1.bf16.msra.mxu0 0
  %2026 = vmatprep.subr.bf16.mxu0 0
  %2027 = vmatpush1.bf16.msra.mxu0 0
  %2028 = vmatprep.subr.bf16.mxu0 0
  %2029 = vmatpush1.bf16.msra.mxu0 0
  %2030 = vmatprep.mubr.bf16.mxu0 0
  %2031 = vmatmul.mubr.bf16.gmra.mrb[0].mxu0 %v1927
  %v2032 = vpop.f32.mrb[0].mxu0
  %v2033 = vadd.f32 %v1948, %v2032
  %v2034 = vpop.f32.mrb[0].mxu0
  %v2035 = vpop.f32.mrb[0].mxu0
  %v2036 = vpop.f32.mrb[0].mxu0
  %2037 = vdwg.mxu0
  %vm2038 = vcmask 11264
  %2039 = vst.msk [vmem:[%s8] sm:$0xf] %vm2038, %v2033
  // Predicated region
  $region34: #{prn_forward_eval.1} parent=0 // pred_check
    _
  $region35: #{prn_forward_eval.1} parent=0 // pred_check_branch
    %2041 = sbr.rel (0) target = $region37
  $region36: #{prn_forward_eval.1} parent=0 // pred_region
    _
  $region37: #{prn_forward_eval.1} parent=0 // pred_fallthru
    _
  // Predicated region
  $region38: #{prn_forward_eval.1} parent=0 // pred_check
    _
  $region39: #{prn_forward_eval.1} parent=0 // pred_check_branch
    %2043 = sbr.rel (0) target = $region41
  $region40: #{prn_forward_eval.1} parent=0 // pred_region
    _
  $region41: #{prn_forward_eval.1} parent=0 // pred_fallthru
    _

</llo_original>
